<compile_context>
chip_gen: v6e
topology: v6e:2x2x1
jax: 0.10.0
libtpu: 0.0.40
codegen_flags: <defaults>
</compile_context>

<pallas_src>
import jax
import jax.numpy as jnp
from jax.experimental import pallas as pl
from jax.experimental.pallas import tpu as pltpu


DEFAULT_TILE_B = 4096       # rows of f32 x per grid step (~12.25 MiB/step)
VMEM_LIMIT_BYTES = 56 * 1024 * 1024   # review: 48-56 MiB; fits v7x's 64 MiB


def mnist_mlp_kernel(x_ref, w1_ref, b1_ref, w2_ref, b2_ref,
                     w3_ref, b3_ref, w4_ref, b4_ref, o_ref):
    # Cast the streamed f32 tile to bf16 in-kernel (hidden under the DMA).
    x = x_ref[...].astype(jnp.bfloat16)
    # first_linear + ReLU  (bf16 operands, f32 accumulation)
    h = jnp.dot(x, w1_ref[...], preferred_element_type=jnp.float32)
    h = jnp.maximum(h + b1_ref[...], 0.0)
    # second_linear + ReLU
    h = jnp.dot(h.astype(jnp.bfloat16), w2_ref[...],
                preferred_element_type=jnp.float32)
    h = jnp.maximum(h + b2_ref[...], 0.0)
    # third_linear + ReLU
    h = jnp.dot(h.astype(jnp.bfloat16), w3_ref[...],
                preferred_element_type=jnp.float32)
    h = jnp.maximum(h + b3_ref[...], 0.0)
    # fourth_linear + Softmax(dim=1)
    logits = jnp.dot(h.astype(jnp.bfloat16), w4_ref[...],
                     preferred_element_type=jnp.float32)
    logits = logits + b4_ref[...]
    m = jnp.max(logits, axis=-1, keepdims=True)
    e = jnp.exp(logits - m)
    denom = jnp.sum(e, axis=-1, keepdims=True)
    # approx reciprocal (EUP): softmax rows sum to 1 within ~1e-3.
    o_ref[...] = (e * pl.reciprocal(denom, approx=True)).astype(o_ref.dtype)


def _round_up(n, m):
    return ((n + m - 1) // m) * m


def mnist_mlp_forward(x_nchw, params, tile_b=DEFAULT_TILE_B):
    """x_nchw: (B, 1, 28, 28). Returns softmax probs (B, 10) f32."""
    b = x_nchw.shape[0]
    # Keep the incoming dtype: no wrapper-side cast/pad (extra HBM passes).
    x = x_nchw.reshape(b, 28 * 28)

    # Batch tile: multiple of 256 rows, capped at the (rounded-up) batch.
    tile_b = min(tile_b, _round_up(b, 256))
    if b > 512:
        # Keep >=2 grid steps so both v7x TensorCores get work.
        tile_b = min(tile_b, _round_up(pl.cdiv(b, 2), 256))
    tile_b = max(tile_b, 256)

    grid = pl.cdiv(b, tile_b)      # last input block may be partial (masked)
    b_pad = grid * tile_b          # output fully tiled; sliced back to b

    (w1, b1), (w2, b2), (w3, b3), (w4, b4) = params
    # Weights are ~26 KB total: casting them in the wrapper is negligible.
    w1, w2, w3, w4 = (w.astype(jnp.bfloat16) for w in (w1, w2, w3, w4))

    def resident(arr):  # full-array block, stays in VMEM across grid steps
        return pl.BlockSpec(arr.shape, lambda i: (0, 0))

    grid_spec = pltpu.PrefetchScalarGridSpec(
        num_scalar_prefetch=0,
        grid=(grid,),
        in_specs=[
            pl.BlockSpec((tile_b, 28 * 28), lambda i: (i, 0)),   # streamed x
            resident(w1), resident(b1),
            resident(w2), resident(b2),
            resident(w3), resident(b3),
            resident(w4), resident(b4),
        ],
        out_specs=pl.BlockSpec((tile_b, 10), lambda i: (i, 0)),
    )

    weight_params = 784 * 16 + 16 * 16 + 16 * 10 + 10 * 10
    cost = pl.CostEstimate(
        flops=2 * b_pad * weight_params,
        transcendentals=b_pad * 11,                      # 10 exp + 1 recip/row
        bytes_accessed=int(b * 784 * x.dtype.itemsize    # x read (dominant)
                           + b_pad * 10 * 4              # probs writeback
                           + weight_params * 2 + 52 * 4),  # weights + biases
    )

    out = pl.pallas_call(
        mnist_mlp_kernel,
        out_shape=jax.ShapeDtypeStruct((b_pad, 10), jnp.float32),
        grid_spec=grid_spec,
        compiler_params=pltpu.CompilerParams(
            dimension_semantics=("parallel",),
            vmem_limit_bytes=VMEM_LIMIT_BYTES),
        cost_estimate=cost,
    )(x, w1, b1, w2, b2, w3, b3, w4, b4)
    return out[:b]


def init_params(key):
    """Deterministic init matching nn.Linear shapes (stored as (in, out))."""
    dims = [(28 * 28, 16), (16, 16), (16, 10), (10, 10)]
    params = []
    for i, (fan_in, fan_out) in enumerate(dims):
        kw, kb = jax.random.split(jax.random.fold_in(key, i))
        bound = 1.0 / jnp.sqrt(fan_in)
        w = jax.random.uniform(kw, (fan_in, fan_out), jnp.float32, -bound, bound)
        # bias kept 2D (1, out) for TPU-friendly broadcasting inside the kernel
        bvec = jax.random.uniform(kb, (1, fan_out), jnp.float32, -bound, bound)
        params.append((w, bvec))
    return params


def reference_forward(x_nchw, params):
    """Plain-JAX reference using the same bf16 operands / f32 accumulation."""
    b = x_nchw.shape[0]
    h = x_nchw.reshape(b, 28 * 28).astype(jnp.bfloat16)
    (w1, b1), (w2, b2), (w3, b3), (w4, b4) = params

    def lin(h, w, bias):
        return jnp.dot(h, w.astype(jnp.bfloat16),
                       preferred_element_type=jnp.float32) + bias

    h = jnp.maximum(lin(h, w1, b1), 0.0).astype(jnp.bfloat16)
    h = jnp.maximum(lin(h, w2, b2), 0.0).astype(jnp.bfloat16)
    h = jnp.maximum(lin(h, w3, b3), 0.0).astype(jnp.bfloat16)
    logits = lin(h, w4, b4)
    return jax.nn.softmax(logits, axis=1)


if __name__ == "__main__":
    key = jax.random.PRNGKey(0)
    k_x, k_p = jax.random.split(key)

    batch = 12  # deliberately not a multiple of 8 to exercise the ragged tail
    x = jax.random.normal(k_x, (batch, 1, 28, 28), dtype=jnp.float32)
    params = init_params(k_p)

    out = mnist_mlp_forward(x, params)
    out = jax.block_until_ready(out)

    ref = reference_forward(x, params)
    assert out.shape == (batch, 10)
    # bf16 operands + approx reciprocal -> relaxed tolerance vs the bf16 ref.
    assert jnp.allclose(out, ref, atol=5e-3, rtol=5e-3)
    assert jnp.allclose(jnp.sum(out, axis=1), 1.0, atol=5e-3)

    print("KERNEL_OK")
</pallas_src>

<mosaic_0001>
module attributes {stable_mosaic.version = 11 : i64} {
  func.func @mnist_mlp_kernel(%arg0: i32, %arg1: memref<256x784xf32, #tpu.memory_space<vmem>>, %arg2: memref<784x16xbf16, #tpu.memory_space<vmem>>, %arg3: memref<1x16xf32, #tpu.memory_space<vmem>>, %arg4: memref<16x16xbf16, #tpu.memory_space<vmem>>, %arg5: memref<1x16xf32, #tpu.memory_space<vmem>>, %arg6: memref<16x10xbf16, #tpu.memory_space<vmem>>, %arg7: memref<1x10xf32, #tpu.memory_space<vmem>>, %arg8: memref<10x10xbf16, #tpu.memory_space<vmem>>, %arg9: memref<1x10xf32, #tpu.memory_space<vmem>>, %arg10: memref<256x10xf32, #tpu.memory_space<vmem>>) attributes {dimension_semantics = [#tpu.dimension_semantics<parallel>], iteration_bounds = array<i64: 1>, scalar_prefetch = 0 : i64, scratch_operands = 0 : i64, tpu.core_type = #tpu.core_type<tc>, window_params = [{transform_indices = @transform_0, window_bounds = array<i64: 256, 784>}, {pipeline_mode = #tpu.pipeline_mode<synchronous>, transform_indices = @transform_1, window_bounds = array<i64: 784, 16>}, {pipeline_mode = #tpu.pipeline_mode<synchronous>, transform_indices = @transform_2, window_bounds = array<i64: 1, 16>}, {pipeline_mode = #tpu.pipeline_mode<synchronous>, transform_indices = @transform_3, window_bounds = array<i64: 16, 16>}, {pipeline_mode = #tpu.pipeline_mode<synchronous>, transform_indices = @transform_4, window_bounds = array<i64: 1, 16>}, {pipeline_mode = #tpu.pipeline_mode<synchronous>, transform_indices = @transform_5, window_bounds = array<i64: 16, 10>}, {pipeline_mode = #tpu.pipeline_mode<synchronous>, transform_indices = @transform_6, window_bounds = array<i64: 1, 10>}, {pipeline_mode = #tpu.pipeline_mode<synchronous>, transform_indices = @transform_7, window_bounds = array<i64: 10, 10>}, {pipeline_mode = #tpu.pipeline_mode<synchronous>, transform_indices = @transform_8, window_bounds = array<i64: 1, 10>}, {transform_indices = @transform_9, window_bounds = array<i64: 256, 10>}]} {
    %c0 = arith.constant 0 : index
    %c0_0 = arith.constant 0 : index
    %0 = vector.load %arg1[%c0, %c0_0] : memref<256x784xf32, #tpu.memory_space<vmem>>, vector<256x784xf32>
    %1 = arith.truncf %0 : vector<256x784xf32> to vector<256x784xbf16>
    %c0_1 = arith.constant 0 : index
    %c0_2 = arith.constant 0 : index
    %2 = vector.load %arg2[%c0_1, %c0_2] : memref<784x16xbf16, #tpu.memory_space<vmem>>, vector<784x16xbf16>
    %cst = arith.constant dense<0.000000e+00> : vector<256x16xf32>
    %3 = tpu.matmul %1, %2, %cst {dimension_numbers = #tpu.dot_dimension_numbers<[1], [0], [0], [1], [0, 0, 1, 1], [], []>} : vector<256x784xbf16>, vector<784x16xbf16>, vector<256x16xf32> -> vector<256x16xf32>
    %c0_3 = arith.constant 0 : index
    %c0_4 = arith.constant 0 : index
    %4 = vector.load %arg3[%c0_3, %c0_4] : memref<1x16xf32, #tpu.memory_space<vmem>>, vector<1x16xf32>
    %5 = vector.broadcast %4 : vector<1x16xf32> to vector<256x16xf32>
    %6 = arith.addf %3, %5 : vector<256x16xf32>
    %cst_5 = arith.constant 0.000000e+00 : f32
    %7 = vector.broadcast %cst_5 : f32 to vector<256x16xf32>
    %8 = arith.maximumf %6, %7 : vector<256x16xf32>
    %9 = arith.truncf %8 : vector<256x16xf32> to vector<256x16xbf16>
    %c0_6 = arith.constant 0 : index
    %c0_7 = arith.constant 0 : index
    %10 = vector.load %arg4[%c0_6, %c0_7] : memref<16x16xbf16, #tpu.memory_space<vmem>>, vector<16x16xbf16>
    %cst_8 = arith.constant dense<0.000000e+00> : vector<256x16xf32>
    %11 = tpu.matmul %9, %10, %cst_8 {dimension_numbers = #tpu.dot_dimension_numbers<[1], [0], [0], [1], [0, 0, 1, 1], [], []>} : vector<256x16xbf16>, vector<16x16xbf16>, vector<256x16xf32> -> vector<256x16xf32>
    %c0_9 = arith.constant 0 : index
    %c0_10 = arith.constant 0 : index
    %12 = vector.load %arg5[%c0_9, %c0_10] : memref<1x16xf32, #tpu.memory_space<vmem>>, vector<1x16xf32>
    %13 = vector.broadcast %12 : vector<1x16xf32> to vector<256x16xf32>
    %14 = arith.addf %11, %13 : vector<256x16xf32>
    %cst_11 = arith.constant 0.000000e+00 : f32
    %15 = vector.broadcast %cst_11 : f32 to vector<256x16xf32>
    %16 = arith.maximumf %14, %15 : vector<256x16xf32>
    %17 = arith.truncf %16 : vector<256x16xf32> to vector<256x16xbf16>
    %c0_12 = arith.constant 0 : index
    %c0_13 = arith.constant 0 : index
    %18 = vector.load %arg6[%c0_12, %c0_13] : memref<16x10xbf16, #tpu.memory_space<vmem>>, vector<16x10xbf16>
    %cst_14 = arith.constant dense<0.000000e+00> : vector<256x10xf32>
    %19 = tpu.matmul %17, %18, %cst_14 {dimension_numbers = #tpu.dot_dimension_numbers<[1], [0], [0], [1], [0, 0, 1, 1], [], []>} : vector<256x16xbf16>, vector<16x10xbf16>, vector<256x10xf32> -> vector<256x10xf32>
    %c0_15 = arith.constant 0 : index
    %c0_16 = arith.constant 0 : index
    %20 = vector.load %arg7[%c0_15, %c0_16] : memref<1x10xf32, #tpu.memory_space<vmem>>, vector<1x10xf32>
    %21 = vector.broadcast %20 : vector<1x10xf32> to vector<256x10xf32>
    %22 = arith.addf %19, %21 : vector<256x10xf32>
    %cst_17 = arith.constant 0.000000e+00 : f32
    %23 = vector.broadcast %cst_17 : f32 to vector<256x10xf32>
    %24 = arith.maximumf %22, %23 : vector<256x10xf32>
    %25 = arith.truncf %24 : vector<256x10xf32> to vector<256x10xbf16>
    %c0_18 = arith.constant 0 : index
    %c0_19 = arith.constant 0 : index
    %26 = vector.load %arg8[%c0_18, %c0_19] : memref<10x10xbf16, #tpu.memory_space<vmem>>, vector<10x10xbf16>
    %cst_20 = arith.constant dense<0.000000e+00> : vector<256x10xf32>
    %27 = tpu.matmul %25, %26, %cst_20 {dimension_numbers = #tpu.dot_dimension_numbers<[1], [0], [0], [1], [0, 0, 1, 1], [], []>} : vector<256x10xbf16>, vector<10x10xbf16>, vector<256x10xf32> -> vector<256x10xf32>
    %c0_21 = arith.constant 0 : index
    %c0_22 = arith.constant 0 : index
    %28 = vector.load %arg9[%c0_21, %c0_22] : memref<1x10xf32, #tpu.memory_space<vmem>>, vector<1x10xf32>
    %29 = vector.broadcast %28 : vector<1x10xf32> to vector<256x10xf32>
    %30 = arith.addf %27, %29 : vector<256x10xf32>
    %cst_23 = arith.constant dense<0xFF800000> : vector<256xf32>
    %31 = vector.multi_reduction <maximumf>, %30, %cst_23 [1] : vector<256x10xf32> to vector<256xf32>
    %32 = vector.shape_cast %31 : vector<256xf32> to vector<256x1xf32>
    %33 = vector.broadcast %32 : vector<256x1xf32> to vector<256x10xf32>
    %34 = arith.subf %30, %33 : vector<256x10xf32>
    %35 = math.exp %34 : vector<256x10xf32>
    %cst_24 = arith.constant dense<0.000000e+00> : vector<256xf32>
    %36 = vector.multi_reduction <add>, %35, %cst_24 [1] : vector<256x10xf32> to vector<256xf32>
    %37 = vector.shape_cast %36 : vector<256xf32> to vector<256x1xf32>
    %38 = tpu.reciprocal %37 {approx = true} : vector<256x1xf32> -> vector<256x1xf32>
    %39 = vector.broadcast %38 : vector<256x1xf32> to vector<256x10xf32>
    %40 = arith.mulf %35, %39 : vector<256x10xf32>
    %c0_25 = arith.constant 0 : index
    %c0_26 = arith.constant 0 : index
    %41 = vector.load %arg10[%c0_25, %c0_26] : memref<256x10xf32, #tpu.memory_space<vmem>>, vector<256x10xf32>
    tpu.vector_store %arg10[%c0_25, %c0_26], %40 {strides = array<i32>} : memref<256x10xf32, #tpu.memory_space<vmem>>, vector<256x10xf32>,
    return
  }
  func.func @transform_0(%arg0: i32) -> (i32, i32) {
    %c0_i32 = arith.constant 0 : i32
    %c0_i32_0 = arith.constant 0 : i32
    return %arg0, %c0_i32 : i32, i32
  }
  func.func @transform_1(%arg0: i32) -> (i32, i32) {
    %c0_i32 = arith.constant 0 : i32
    %c0_i32_0 = arith.constant 0 : i32
    %c0_i32_1 = arith.constant 0 : i32
    return %c0_i32, %c0_i32_0 : i32, i32
  }
  func.func @transform_2(%arg0: i32) -> (i32, i32) {
    %c0_i32 = arith.constant 0 : i32
    %c0_i32_0 = arith.constant 0 : i32
    %c0_i32_1 = arith.constant 0 : i32
    return %c0_i32, %c0_i32_0 : i32, i32
  }
  func.func @transform_3(%arg0: i32) -> (i32, i32) {
    %c0_i32 = arith.constant 0 : i32
    %c0_i32_0 = arith.constant 0 : i32
    %c0_i32_1 = arith.constant 0 : i32
    return %c0_i32, %c0_i32_0 : i32, i32
  }
  func.func @transform_4(%arg0: i32) -> (i32, i32) {
    %c0_i32 = arith.constant 0 : i32
    %c0_i32_0 = arith.constant 0 : i32
    %c0_i32_1 = arith.constant 0 : i32
    return %c0_i32, %c0_i32_0 : i32, i32
  }
  func.func @transform_5(%arg0: i32) -> (i32, i32) {
    %c0_i32 = arith.constant 0 : i32
    %c0_i32_0 = arith.constant 0 : i32
    %c0_i32_1 = arith.constant 0 : i32
    return %c0_i32, %c0_i32_0 : i32, i32
  }
  func.func @transform_6(%arg0: i32) -> (i32, i32) {
    %c0_i32 = arith.constant 0 : i32
    %c0_i32_0 = arith.constant 0 : i32
    %c0_i32_1 = arith.constant 0 : i32
    return %c0_i32, %c0_i32_0 : i32, i32
  }
  func.func @transform_7(%arg0: i32) -> (i32, i32) {
    %c0_i32 = arith.constant 0 : i32
    %c0_i32_0 = arith.constant 0 : i32
    %c0_i32_1 = arith.constant 0 : i32
    return %c0_i32, %c0_i32_0 : i32, i32
  }
  func.func @transform_8(%arg0: i32) -> (i32, i32) {
    %c0_i32 = arith.constant 0 : i32
    %c0_i32_0 = arith.constant 0 : i32
    %c0_i32_1 = arith.constant 0 : i32
    return %c0_i32, %c0_i32_0 : i32, i32
  }
  func.func @transform_9(%arg0: i32) -> (i32, i32) {
    %c0_i32 = arith.constant 0 : i32
    %c0_i32_0 = arith.constant 0 : i32
    return %arg0, %c0_i32 : i32, i32
  }
}

</mosaic_0001>

<llo_original>
// kernel: tpu_custom_call.1
$region0: #{tpu_custom_call.1}
  #allocation0 [shape = 'u32[]', space=smem, size = 0x4, offset = 0x4, fixed_abs, tag = 'smem constant byte address 0x4 - core index']
  #allocation1 [shape = 'u32[144,128]{1,0:T(1,128)}', space=vmem, size = 0x12000, scoped, tag = 'internal scratch']
  %s0 = inlined_call_operand.vmem [shape: f32[12,784], index: 0, kind: input, shape index: {}]
  %s1 = inlined_call_operand.vmem [shape: bf16[784,16], index: 1, kind: input, shape index: {}]
  %s2 = inlined_call_operand.vmem [shape: f32[1,16], index: 2, kind: input, shape index: {}]
  %s3 = inlined_call_operand.vmem [shape: bf16[16,16], index: 3, kind: input, shape index: {}]
  %s4 = inlined_call_operand.vmem [shape: f32[1,16], index: 4, kind: input, shape index: {}]
  %s5 = inlined_call_operand.vmem [shape: bf16[16,10], index: 5, kind: input, shape index: {}]
  %s6 = inlined_call_operand.vmem [shape: f32[1,10], index: 6, kind: input, shape index: {}]
  %s7 = inlined_call_operand.vmem [shape: bf16[10,10], index: 7, kind: input, shape index: {}]
  %s8 = inlined_call_operand.vmem [shape: f32[1,10], index: 8, kind: input, shape index: {}]
  %s9 = inlined_call_operand.vmem [shape: f32[256,10], index: 9, kind: output, shape index: {}]
  %s10 = sld [smem:[#allocation0]]
  $region46: #{tpu_custom_call.1} parent=0
    _
  %s12 = ssub.s32 1, %s10
  %s13 = scalar_select 0, %s12, %s10
  // Predicated region
  $region2: #{tpu_custom_call.1} parent=0 // pred_check
    _
  $region3: #{tpu_custom_call.1} parent=0 // pred_check_branch
    %15 = sbr.rel (0) target = $region5
  $region4: #{tpu_custom_call.1} parent=0 // pred_region
    _
  $region5: #{tpu_custom_call.1} parent=0 // pred_fallthru
    _
  // Predicated region
  $region6: #{tpu_custom_call.1} parent=0 // pred_check
    _
  $region7: #{tpu_custom_call.1} parent=0 // pred_check_branch
    %17 = sbr.rel (0) target = $region9
  $region8: #{tpu_custom_call.1} parent=0 // pred_region
    _
  $region9: #{tpu_custom_call.1} parent=0 // pred_fallthru
    _
  // Predicated region
  $region10: #{tpu_custom_call.1} parent=0 // pred_check
    _
  $region11: #{tpu_custom_call.1} parent=0 // pred_check_branch
    %19 = sbr.rel (0) target = $region13
  $region12: #{tpu_custom_call.1} parent=0 // pred_region
    _
  $region13: #{tpu_custom_call.1} parent=0 // pred_fallthru
    _
  // Predicated region
  $region14: #{tpu_custom_call.1} parent=0 // pred_check
    _
  $region15: #{tpu_custom_call.1} parent=0 // pred_check_branch
    %21 = sbr.rel (0) target = $region17
  $region16: #{tpu_custom_call.1} parent=0 // pred_region
    _
  $region17: #{tpu_custom_call.1} parent=0 // pred_fallthru
    _
  // Predicated region
  $region18: #{tpu_custom_call.1} parent=0 // pred_check
    _
  $region19: #{tpu_custom_call.1} parent=0 // pred_check_branch
    %23 = sbr.rel (0) target = $region21
  $region20: #{tpu_custom_call.1} parent=0 // pred_region
    _
  $region21: #{tpu_custom_call.1} parent=0 // pred_fallthru
    _
  // Predicated region
  $region22: #{tpu_custom_call.1} parent=0 // pred_check
    _
  $region23: #{tpu_custom_call.1} parent=0 // pred_check_branch
    %25 = sbr.rel (0) target = $region25
  $region24: #{tpu_custom_call.1} parent=0 // pred_region
    _
  $region25: #{tpu_custom_call.1} parent=0 // pred_fallthru
    _
  // Predicated region
  $region26: #{tpu_custom_call.1} parent=0 // pred_check
    _
  $region27: #{tpu_custom_call.1} parent=0 // pred_check_branch
    %27 = sbr.rel (0) target = $region29
  $region28: #{tpu_custom_call.1} parent=0 // pred_region
    _
  $region29: #{tpu_custom_call.1} parent=0 // pred_fallthru
    _
  // Predicated region
  $region30: #{tpu_custom_call.1} parent=0 // pred_check
    _
  $region31: #{tpu_custom_call.1} parent=0 // pred_check_branch
    %29 = sbr.rel (0) target = $region33
  $region32: #{tpu_custom_call.1} parent=0 // pred_region
    _
  $region33: #{tpu_custom_call.1} parent=0 // pred_fallthru
    _
  // Predicated region
  $region34: #{tpu_custom_call.1} parent=0 // pred_check
    _
  $region35: #{tpu_custom_call.1} parent=0 // pred_check_branch
    %31 = sbr.rel (0) target = $region37
  $region36: #{tpu_custom_call.1} parent=0 // pred_region
    _
  $region37: #{tpu_custom_call.1} parent=0 // pred_fallthru
    _
  %v33 = vld [vmem:[%s0] sm:$0xff]
  %v34 = vld [vmem:[%s0 + $0x8] sm:$0xff]
  %v35 = vld [vmem:[%s0 + $0x10] sm:$0xff]
  %v36 = vld [vmem:[%s0 + $0x18] sm:$0xff]
  %v37 = vld [vmem:[%s0 + $0x20] sm:$0xff]
  %v38 = vld [vmem:[%s0 + $0x28] sm:$0xff]
  %v39 = vld [vmem:[%s0 + $0x30] sm:$0xff]
  %v40 = vld [vmem:[%s0 + $0x38] sm:$0xff]
  %v41 = vld [vmem:[%s0 + $0x40] sm:$0xff]
  %v42 = vld [vmem:[%s0 + $0x48] sm:$0xff]
  %v43 = vld [vmem:[%s0 + $0x50] sm:$0xff]
  %v44 = vld [vmem:[%s0 + $0x58] sm:$0xff]
  %v45 = vld [vmem:[%s0 + $0x60] sm:$0xff]
  %v46 = vld [vmem:[%s0 + $0x68] sm:$0xff]
  %v47 = vld [vmem:[%s0 + $0x70] sm:$0xff]
  %v48 = vld [vmem:[%s0 + $0x78] sm:$0xff]
  %v49 = vld [vmem:[%s0 + $0x80] sm:$0xff]
  %v50 = vld [vmem:[%s0 + $0x88] sm:$0xff]
  %v51 = vld [vmem:[%s0 + $0x90] sm:$0xff]
  %v52 = vld [vmem:[%s0 + $0x98] sm:$0xff]
  %v53 = vld [vmem:[%s0 + $0xa0] sm:$0xff]
  %v54 = vld [vmem:[%s0 + $0xa8] sm:$0xff]
  %v55 = vld [vmem:[%s0 + $0xb0] sm:$0xff]
  %v56 = vld [vmem:[%s0 + $0xb8] sm:$0xff]
  %v57 = vld [vmem:[%s0 + $0xc0] sm:$0xff]
  %v58 = vld [vmem:[%s0 + $0xc8] sm:$0xff]
  %v59 = vld [vmem:[%s0 + $0xd0] sm:$0xff]
  %v60 = vld [vmem:[%s0 + $0xd8] sm:$0xff]
  %v61 = vld [vmem:[%s0 + $0xe0] sm:$0xff]
  %v62 = vld [vmem:[%s0 + $0xe8] sm:$0xff]
  %v63 = vld [vmem:[%s0 + $0xf0] sm:$0xff]
  %v64 = vld [vmem:[%s0 + $0xf8] sm:$0xff]
  %v65 = vld [vmem:[%s0 + $0x100] sm:$0xff]
  %v66 = vld [vmem:[%s0 + $0x108] sm:$0xff]
  %v67 = vld [vmem:[%s0 + $0x110] sm:$0xff]
  %v68 = vld [vmem:[%s0 + $0x118] sm:$0xff]
  %v69 = vld [vmem:[%s0 + $0x120] sm:$0xff]
  %v70 = vld [vmem:[%s0 + $0x128] sm:$0xff]
  %v71 = vld [vmem:[%s0 + $0x130] sm:$0xff]
  %v72 = vld [vmem:[%s0 + $0x138] sm:$0xff]
  %v73 = vld [vmem:[%s0 + $0x140] sm:$0xff]
  %v74 = vld [vmem:[%s0 + $0x148] sm:$0xff]
  %v75 = vld [vmem:[%s0 + $0x150] sm:$0xff]
  %v76 = vld [vmem:[%s0 + $0x158] sm:$0xff]
  %v77 = vld [vmem:[%s0 + $0x160] sm:$0xff]
  %v78 = vld [vmem:[%s0 + $0x168] sm:$0xff]
  %v79 = vld [vmem:[%s0 + $0x170] sm:$0xff]
  %v80 = vld [vmem:[%s0 + $0x178] sm:$0xff]
  %v81 = vld [vmem:[%s0 + $0x180] sm:$0xff]
  %v82 = vld [vmem:[%s0 + $0x188] sm:$0xff]
  %v83 = vld [vmem:[%s0 + $0x190] sm:$0xff]
  %v84 = vld [vmem:[%s0 + $0x198] sm:$0xff]
  %v85 = vld [vmem:[%s0 + $0x1a0] sm:$0xff]
  %v86 = vld [vmem:[%s0 + $0x1a8] sm:$0xff]
  %v87 = vld [vmem:[%s0 + $0x1b0] sm:$0xff]
  %v88 = vld [vmem:[%s0 + $0x1b8] sm:$0xff]
  %v89 = vld [vmem:[%s0 + $0x1c0] sm:$0xff]
  %v90 = vld [vmem:[%s0 + $0x1c8] sm:$0xff]
  %v91 = vld [vmem:[%s0 + $0x1d0] sm:$0xff]
  %v92 = vld [vmem:[%s0 + $0x1d8] sm:$0xff]
  %v93 = vld [vmem:[%s0 + $0x1e0] sm:$0xff]
  %v94 = vld [vmem:[%s0 + $0x1e8] sm:$0xff]
  %v95 = vld [vmem:[%s0 + $0x1f0] sm:$0xff]
  %v96 = vld [vmem:[%s0 + $0x1f8] sm:$0xff]
  %v97 = vld [vmem:[%s0 + $0x200] sm:$0xff]
  %v98 = vld [vmem:[%s0 + $0x208] sm:$0xff]
  %v99 = vld [vmem:[%s0 + $0x210] sm:$0xff]
  %v100 = vld [vmem:[%s0 + $0x218] sm:$0xff]
  %v101 = vld [vmem:[%s0 + $0x220] sm:$0xff]
  %v102 = vld [vmem:[%s0 + $0x228] sm:$0xff]
  %v103 = vld [vmem:[%s0 + $0x230] sm:$0xff]
  %v104 = vld [vmem:[%s0 + $0x238] sm:$0xff]
  %v105 = vld [vmem:[%s0 + $0x240] sm:$0xff]
  %v106 = vld [vmem:[%s0 + $0x248] sm:$0xff]
  %v107 = vld [vmem:[%s0 + $0x250] sm:$0xff]
  %v108 = vld [vmem:[%s0 + $0x258] sm:$0xff]
  %v109 = vld [vmem:[%s0 + $0x260] sm:$0xff]
  %v110 = vld [vmem:[%s0 + $0x268] sm:$0xff]
  %v111 = vld [vmem:[%s0 + $0x270] sm:$0xff]
  %v112 = vld [vmem:[%s0 + $0x278] sm:$0xff]
  %v113 = vld [vmem:[%s0 + $0x280] sm:$0xff]
  %v114 = vld [vmem:[%s0 + $0x288] sm:$0xff]
  %v115 = vld [vmem:[%s0 + $0x290] sm:$0xff]
  %v116 = vld [vmem:[%s0 + $0x298] sm:$0xff]
  %v117 = vld [vmem:[%s0 + $0x2a0] sm:$0xff]
  %v118 = vld [vmem:[%s0 + $0x2a8] sm:$0xff]
  %v119 = vld [vmem:[%s0 + $0x2b0] sm:$0xff]
  %v120 = vld [vmem:[%s0 + $0x2b8] sm:$0xff]
  %v121 = vld [vmem:[%s0 + $0x2c0] sm:$0xff]
  %v122 = vld [vmem:[%s0 + $0x2c8] sm:$0xff]
  %v123 = vld [vmem:[%s0 + $0x2d0] sm:$0xff]
  %v124 = vld [vmem:[%s0 + $0x2d8] sm:$0xff]
  %v125 = vld [vmem:[%s0 + $0x2e0] sm:$0xff]
  %v126 = vld [vmem:[%s0 + $0x2e8] sm:$0xff]
  %v127 = vld [vmem:[%s0 + $0x2f0] sm:$0xff]
  %v128 = vld [vmem:[%s0 + $0x2f8] sm:$0xff]
  %v129 = vld [vmem:[%s0 + $0x300] sm:$0xff]
  %v130 = vld [vmem:[%s0 + $0x308] sm:$0xff]
  %v131 = vld [vmem:[%s0 + $0x310] sm:$0xff]
  %v132 = vld [vmem:[%s0 + $0x318] sm:$0xff]
  %v133 = vld [vmem:[%s0 + $0x320] sm:$0xff]
  %v134 = vld [vmem:[%s0 + $0x328] sm:$0xff]
  %v135 = vld [vmem:[%s0 + $0x330] sm:$0xff]
  %v136 = vld [vmem:[%s0 + $0x338] sm:$0xff]
  %v137 = vld [vmem:[%s0 + $0x340] sm:$0xff]
  %v138 = vld [vmem:[%s0 + $0x348] sm:$0xff]
  %v139 = vld [vmem:[%s0 + $0x350] sm:$0xff]
  %v140 = vld [vmem:[%s0 + $0x358] sm:$0xff]
  %v141 = vld [vmem:[%s0 + $0x360] sm:$0xff]
  %v142 = vld [vmem:[%s0 + $0x368] sm:$0xff]
  %v143 = vld [vmem:[%s0 + $0x370] sm:$0xff]
  %v144 = vld [vmem:[%s0 + $0x378] sm:$0xff]
  %v145 = vld [vmem:[%s0 + $0x380] sm:$0xff]
  %v146 = vld [vmem:[%s0 + $0x388] sm:$0xff]
  %v147 = vld [vmem:[%s0 + $0x390] sm:$0xff]
  %v148 = vld [vmem:[%s0 + $0x398] sm:$0xff]
  %v149 = vld [vmem:[%s0 + $0x3a0] sm:$0xff]
  %v150 = vld [vmem:[%s0 + $0x3a8] sm:$0xff]
  %v151 = vld [vmem:[%s0 + $0x3b0] sm:$0xff]
  %v152 = vld [vmem:[%s0 + $0x3b8] sm:$0xff]
  %v153 = vld [vmem:[%s0 + $0x3c0] sm:$0xff]
  %v154 = vld [vmem:[%s0 + $0x3c8] sm:$0xff]
  %v155 = vld [vmem:[%s0 + $0x3d0] sm:$0xff]
  %v156 = vld [vmem:[%s0 + $0x3d8] sm:$0xff]
  %v157 = vld [vmem:[%s0 + $0x3e0] sm:$0xff]
  %v158 = vld [vmem:[%s0 + $0x3e8] sm:$0xff]
  %v159 = vld [vmem:[%s0 + $0x3f0] sm:$0xff]
  %v160 = vld [vmem:[%s0 + $0x3f8] sm:$0xff]
  %v161 = vld [vmem:[%s0 + $0x400] sm:$0xff]
  %v162 = vld [vmem:[%s0 + $0x408] sm:$0xff]
  %v163 = vld [vmem:[%s0 + $0x410] sm:$0xff]
  %v164 = vld [vmem:[%s0 + $0x418] sm:$0xff]
  %v165 = vld [vmem:[%s0 + $0x420] sm:$0xff]
  %v166 = vld [vmem:[%s0 + $0x428] sm:$0xff]
  %v167 = vld [vmem:[%s0 + $0x430] sm:$0xff]
  %v168 = vld [vmem:[%s0 + $0x438] sm:$0xff]
  %v169 = vld [vmem:[%s0 + $0x440] sm:$0xff]
  %v170 = vld [vmem:[%s0 + $0x448] sm:$0xff]
  %v171 = vld [vmem:[%s0 + $0x450] sm:$0xff]
  %v172 = vld [vmem:[%s0 + $0x458] sm:$0xff]
  %v173 = vld [vmem:[%s0 + $0x460] sm:$0xff]
  %v174 = vld [vmem:[%s0 + $0x468] sm:$0xff]
  %v175 = vld [vmem:[%s0 + $0x470] sm:$0xff]
  %v176 = vld [vmem:[%s0 + $0x478] sm:$0xff]
  %v177 = vld [vmem:[%s0 + $0x480] sm:$0xff]
  %v178 = vld [vmem:[%s0 + $0x488] sm:$0xff]
  %v179 = vld [vmem:[%s0 + $0x490] sm:$0xff]
  %v180 = vld [vmem:[%s0 + $0x498] sm:$0xff]
  %v181 = vld [vmem:[%s0 + $0x4a0] sm:$0xff]
  %v182 = vld [vmem:[%s0 + $0x4a8] sm:$0xff]
  %v183 = vld [vmem:[%s0 + $0x4b0] sm:$0xff]
  %v184 = vld [vmem:[%s0 + $0x4b8] sm:$0xff]
  %v185 = vld [vmem:[%s0 + $0x4c0] sm:$0xff]
  %v186 = vld [vmem:[%s0 + $0x4c8] sm:$0xff]
  %v187 = vld [vmem:[%s0 + $0x4d0] sm:$0xff]
  %v188 = vld [vmem:[%s0 + $0x4d8] sm:$0xff]
  %v189 = vld [vmem:[%s0 + $0x4e0] sm:$0xff]
  %v190 = vld [vmem:[%s0 + $0x4e8] sm:$0xff]
  %v191 = vld [vmem:[%s0 + $0x4f0] sm:$0xff]
  %v192 = vld [vmem:[%s0 + $0x4f8] sm:$0xff]
  %v193 = vld [vmem:[%s0 + $0x500] sm:$0xff]
  %v194 = vld [vmem:[%s0 + $0x508] sm:$0xff]
  %v195 = vld [vmem:[%s0 + $0x510] sm:$0xff]
  %v196 = vld [vmem:[%s0 + $0x518] sm:$0xff]
  %v197 = vld [vmem:[%s0 + $0x520] sm:$0xff]
  %v198 = vld [vmem:[%s0 + $0x528] sm:$0xff]
  %v199 = vld [vmem:[%s0 + $0x530] sm:$0xff]
  %v200 = vld [vmem:[%s0 + $0x538] sm:$0xff]
  %v201 = vld [vmem:[%s0 + $0x540] sm:$0xff]
  %v202 = vld [vmem:[%s0 + $0x548] sm:$0xff]
  %v203 = vld [vmem:[%s0 + $0x550] sm:$0xff]
  %v204 = vld [vmem:[%s0 + $0x558] sm:$0xff]
  %v205 = vld [vmem:[%s0 + $0x560] sm:$0xff]
  %v206 = vld [vmem:[%s0 + $0x568] sm:$0xff]
  %v207 = vld [vmem:[%s0 + $0x570] sm:$0xff]
  %v208 = vld [vmem:[%s0 + $0x578] sm:$0xff]
  %v209 = vld [vmem:[%s0 + $0x580] sm:$0xff]
  %v210 = vld [vmem:[%s0 + $0x588] sm:$0xff]
  %v211 = vld [vmem:[%s0 + $0x590] sm:$0xff]
  %v212 = vld [vmem:[%s0 + $0x598] sm:$0xff]
  %v213 = vld [vmem:[%s0 + $0x5a0] sm:$0xff]
  %v214 = vld [vmem:[%s0 + $0x5a8] sm:$0xff]
  %v215 = vld [vmem:[%s0 + $0x5b0] sm:$0xff]
  %v216 = vld [vmem:[%s0 + $0x5b8] sm:$0xff]
  %v217 = vld [vmem:[%s0 + $0x5c0] sm:$0xff]
  %v218 = vld [vmem:[%s0 + $0x5c8] sm:$0xff]
  %v219 = vld [vmem:[%s0 + $0x5d0] sm:$0xff]
  %v220 = vld [vmem:[%s0 + $0x5d8] sm:$0xff]
  %v221 = vld [vmem:[%s0 + $0x5e0] sm:$0xff]
  %v222 = vld [vmem:[%s0 + $0x5e8] sm:$0xff]
  %v223 = vld [vmem:[%s0 + $0x5f0] sm:$0xff]
  %v224 = vld [vmem:[%s0 + $0x5f8] sm:$0xff]
  %v225 = vld [vmem:[%s0 + $0x600] sm:$0xff]
  %v226 = vld [vmem:[%s0 + $0x608] sm:$0xff]
  %v227 = vld [vmem:[%s0 + $0x610] sm:$0xff]
  %v228 = vld [vmem:[%s0 + $0x618] sm:$0xff]
  %v229 = vld [vmem:[%s0 + $0x620] sm:$0xff]
  %v230 = vld [vmem:[%s0 + $0x628] sm:$0xff]
  %v231 = vld [vmem:[%s0 + $0x630] sm:$0xff]
  %v232 = vld [vmem:[%s0 + $0x638] sm:$0xff]
  %v233 = vld [vmem:[%s0 + $0x640] sm:$0xff]
  %v234 = vld [vmem:[%s0 + $0x648] sm:$0xff]
  %v235 = vld [vmem:[%s0 + $0x650] sm:$0xff]
  %v236 = vld [vmem:[%s0 + $0x658] sm:$0xff]
  %v237 = vld [vmem:[%s0 + $0x660] sm:$0xff]
  %v238 = vld [vmem:[%s0 + $0x668] sm:$0xff]
  %v239 = vld [vmem:[%s0 + $0x670] sm:$0xff]
  %v240 = vld [vmem:[%s0 + $0x678] sm:$0xff]
  %v241 = vld [vmem:[%s0 + $0x680] sm:$0xff]
  %v242 = vld [vmem:[%s0 + $0x688] sm:$0xff]
  %v243 = vld [vmem:[%s0 + $0x690] sm:$0xff]
  %v244 = vld [vmem:[%s0 + $0x698] sm:$0xff]
  %v245 = vld [vmem:[%s0 + $0x6a0] sm:$0xff]
  %v246 = vld [vmem:[%s0 + $0x6a8] sm:$0xff]
  %v247 = vld [vmem:[%s0 + $0x6b0] sm:$0xff]
  %v248 = vld [vmem:[%s0 + $0x6b8] sm:$0xff]
  %v249 = vld [vmem:[%s0 + $0x6c0] sm:$0xff]
  %v250 = vld [vmem:[%s0 + $0x6c8] sm:$0xff]
  %v251 = vld [vmem:[%s0 + $0x6d0] sm:$0xff]
  %v252 = vld [vmem:[%s0 + $0x6d8] sm:$0xff]
  %v253 = vld [vmem:[%s0 + $0x6e0] sm:$0xff]
  %v254 = vld [vmem:[%s0 + $0x6e8] sm:$0xff]
  %v255 = vld [vmem:[%s0 + $0x6f0] sm:$0xff]
  %v256 = vld [vmem:[%s0 + $0x6f8] sm:$0xff]
  %v257 = vpack.c.bf16 %v40, %v33
  %v258 = vpack.c.bf16 %v41, %v34
  %v259 = vpack.c.bf16 %v42, %v35
  %v260 = vpack.c.bf16 %v43, %v36
  %v261 = vpack.c.bf16 %v44, %v37
  %v262 = vpack.c.bf16 %v45, %v38
  %v263 = vpack.c.bf16 %v46, %v39
  %v264 = vpack.c.bf16 %v54, %v47
  %v265 = vpack.c.bf16 %v55, %v48
  %v266 = vpack.c.bf16 %v56, %v49
  %v267 = vpack.c.bf16 %v57, %v50
  %v268 = vpack.c.bf16 %v58, %v51
  %v269 = vpack.c.bf16 %v59, %v52
  %v270 = vpack.c.bf16 %v60, %v53
  %v271 = vpack.c.bf16 %v68, %v61
  %v272 = vpack.c.bf16 %v69, %v62
  %v273 = vpack.c.bf16 %v70, %v63
  %v274 = vpack.c.bf16 %v71, %v64
  %v275 = vpack.c.bf16 %v72, %v65
  %v276 = vpack.c.bf16 %v73, %v66
  %v277 = vpack.c.bf16 %v74, %v67
  %v278 = vpack.c.bf16 %v82, %v75
  %v279 = vpack.c.bf16 %v83, %v76
  %v280 = vpack.c.bf16 %v84, %v77
  %v281 = vpack.c.bf16 %v85, %v78
  %v282 = vpack.c.bf16 %v86, %v79
  %v283 = vpack.c.bf16 %v87, %v80
  %v284 = vpack.c.bf16 %v88, %v81
  %v285 = vpack.c.bf16 %v96, %v89
  %v286 = vpack.c.bf16 %v97, %v90
  %v287 = vpack.c.bf16 %v98, %v91
  %v288 = vpack.c.bf16 %v99, %v92
  %v289 = vpack.c.bf16 %v100, %v93
  %v290 = vpack.c.bf16 %v101, %v94
  %v291 = vpack.c.bf16 %v102, %v95
  %v292 = vpack.c.bf16 %v110, %v103
  %v293 = vpack.c.bf16 %v111, %v104
  %v294 = vpack.c.bf16 %v112, %v105
  %v295 = vpack.c.bf16 %v113, %v106
  %v296 = vpack.c.bf16 %v114, %v107
  %v297 = vpack.c.bf16 %v115, %v108
  %v298 = vpack.c.bf16 %v116, %v109
  %v299 = vpack.c.bf16 %v124, %v117
  %v300 = vpack.c.bf16 %v125, %v118
  %v301 = vpack.c.bf16 %v126, %v119
  %v302 = vpack.c.bf16 %v127, %v120
  %v303 = vpack.c.bf16 %v128, %v121
  %v304 = vpack.c.bf16 %v129, %v122
  %v305 = vpack.c.bf16 %v130, %v123
  %v306 = vpack.c.bf16 %v138, %v131
  %v307 = vpack.c.bf16 %v139, %v132
  %v308 = vpack.c.bf16 %v140, %v133
  %v309 = vpack.c.bf16 %v141, %v134
  %v310 = vpack.c.bf16 %v142, %v135
  %v311 = vpack.c.bf16 %v143, %v136
  %v312 = vpack.c.bf16 %v144, %v137
  %v313 = vpack.c.bf16 %v152, %v145
  %v314 = vpack.c.bf16 %v153, %v146
  %v315 = vpack.c.bf16 %v154, %v147
  %v316 = vpack.c.bf16 %v155, %v148
  %v317 = vpack.c.bf16 %v156, %v149
  %v318 = vpack.c.bf16 %v157, %v150
  %v319 = vpack.c.bf16 %v158, %v151
  %v320 = vpack.c.bf16 %v166, %v159
  %v321 = vpack.c.bf16 %v167, %v160
  %v322 = vpack.c.bf16 %v168, %v161
  %v323 = vpack.c.bf16 %v169, %v162
  %v324 = vpack.c.bf16 %v170, %v163
  %v325 = vpack.c.bf16 %v171, %v164
  %v326 = vpack.c.bf16 %v172, %v165
  %v327 = vpack.c.bf16 %v180, %v173
  %v328 = vpack.c.bf16 %v181, %v174
  %v329 = vpack.c.bf16 %v182, %v175
  %v330 = vpack.c.bf16 %v183, %v176
  %v331 = vpack.c.bf16 %v184, %v177
  %v332 = vpack.c.bf16 %v185, %v178
  %v333 = vpack.c.bf16 %v186, %v179
  %v334 = vpack.c.bf16 %v194, %v187
  %v335 = vpack.c.bf16 %v195, %v188
  %v336 = vpack.c.bf16 %v196, %v189
  %v337 = vpack.c.bf16 %v197, %v190
  %v338 = vpack.c.bf16 %v198, %v191
  %v339 = vpack.c.bf16 %v199, %v192
  %v340 = vpack.c.bf16 %v200, %v193
  %v341 = vpack.c.bf16 %v208, %v201
  %v342 = vpack.c.bf16 %v209, %v202
  %v343 = vpack.c.bf16 %v210, %v203
  %v344 = vpack.c.bf16 %v211, %v204
  %v345 = vpack.c.bf16 %v212, %v205
  %v346 = vpack.c.bf16 %v213, %v206
  %v347 = vpack.c.bf16 %v214, %v207
  %v348 = vpack.c.bf16 %v222, %v215
  %v349 = vpack.c.bf16 %v223, %v216
  %v350 = vpack.c.bf16 %v224, %v217
  %v351 = vpack.c.bf16 %v225, %v218
  %v352 = vpack.c.bf16 %v226, %v219
  %v353 = vpack.c.bf16 %v227, %v220
  %v354 = vpack.c.bf16 %v228, %v221
  %v355 = vpack.c.bf16 %v236, %v229
  %v356 = vpack.c.bf16 %v237, %v230
  %v357 = vpack.c.bf16 %v238, %v231
  %v358 = vpack.c.bf16 %v239, %v232
  %v359 = vpack.c.bf16 %v240, %v233
  %v360 = vpack.c.bf16 %v241, %v234
  %v361 = vpack.c.bf16 %v242, %v235
  %v362 = vpack.c.bf16 %v250, %v243
  %v363 = vpack.c.bf16 %v251, %v244
  %v364 = vpack.c.bf16 %v252, %v245
  %v365 = vpack.c.bf16 %v253, %v246
  %v366 = vpack.c.bf16 %v254, %v247
  %v367 = vpack.c.bf16 %v255, %v248
  %v368 = vpack.c.bf16 %v256, %v249
  %v369 = vld [vmem:[%s1] sm:$0xf]
  %v370 = vld [vmem:[%s1 + $0x4] sm:$0xf]
  %v371 = vld [vmem:[%s1 + $0x8] sm:$0xf]
  %v372 = vld [vmem:[%s1 + $0xc] sm:$0xf]
  %v373 = vld [vmem:[%s1 + $0x10] sm:$0xf]
  %v374 = vld [vmem:[%s1 + $0x14] sm:$0xf]
  %v375 = vld [vmem:[%s1 + $0x18] sm:$0xf]
  %v376 = vld [vmem:[%s1 + $0x1c] sm:$0xf]
  %v377 = vld [vmem:[%s1 + $0x20] sm:$0xf]
  %v378 = vld [vmem:[%s1 + $0x24] sm:$0xf]
  %v379 = vld [vmem:[%s1 + $0x28] sm:$0xf]
  %v380 = vld [vmem:[%s1 + $0x2c] sm:$0xf]
  %v381 = vld [vmem:[%s1 + $0x30] sm:$0xf]
  %v382 = vld [vmem:[%s1 + $0x34] sm:$0xf]
  %v383 = vld [vmem:[%s1 + $0x38] sm:$0xf]
  %v384 = vld [vmem:[%s1 + $0x3c] sm:$0xf]
  %v385 = vld [vmem:[%s1 + $0x40] sm:$0xf]
  %v386 = vld [vmem:[%s1 + $0x44] sm:$0xf]
  %v387 = vld [vmem:[%s1 + $0x48] sm:$0xf]
  %v388 = vld [vmem:[%s1 + $0x4c] sm:$0xf]
  %v389 = vld [vmem:[%s1 + $0x50] sm:$0xf]
  %v390 = vld [vmem:[%s1 + $0x54] sm:$0xf]
  %v391 = vld [vmem:[%s1 + $0x58] sm:$0xf]
  %v392 = vld [vmem:[%s1 + $0x5c] sm:$0xf]
  %v393 = vld [vmem:[%s1 + $0x60] sm:$0xf]
  %v394 = vld [vmem:[%s1 + $0x64] sm:$0xf]
  %v395 = vld [vmem:[%s1 + $0x68] sm:$0xf]
  %v396 = vld [vmem:[%s1 + $0x6c] sm:$0xf]
  %v397 = vld [vmem:[%s1 + $0x70] sm:$0xf]
  %v398 = vld [vmem:[%s1 + $0x74] sm:$0xf]
  %v399 = vld [vmem:[%s1 + $0x78] sm:$0xf]
  %v400 = vld [vmem:[%s1 + $0x7c] sm:$0xf]
  %v401 = vld [vmem:[%s1 + $0x80] sm:$0xf]
  %v402 = vld [vmem:[%s1 + $0x84] sm:$0xf]
  %v403 = vld [vmem:[%s1 + $0x88] sm:$0xf]
  %v404 = vld [vmem:[%s1 + $0x8c] sm:$0xf]
  %v405 = vld [vmem:[%s1 + $0x90] sm:$0xf]
  %v406 = vld [vmem:[%s1 + $0x94] sm:$0xf]
  %v407 = vld [vmem:[%s1 + $0x98] sm:$0xf]
  %v408 = vld [vmem:[%s1 + $0x9c] sm:$0xf]
  %v409 = vld [vmem:[%s1 + $0xa0] sm:$0xf]
  %v410 = vld [vmem:[%s1 + $0xa4] sm:$0xf]
  %v411 = vld [vmem:[%s1 + $0xa8] sm:$0xf]
  %v412 = vld [vmem:[%s1 + $0xac] sm:$0xf]
  %v413 = vld [vmem:[%s1 + $0xb0] sm:$0xf]
  %v414 = vld [vmem:[%s1 + $0xb4] sm:$0xf]
  %v415 = vld [vmem:[%s1 + $0xb8] sm:$0xf]
  %v416 = vld [vmem:[%s1 + $0xbc] sm:$0xf]
  %v417 = vld [vmem:[%s1 + $0xc0] sm:$0xf]
  %v418 = vld [vmem:[%s1 + $0xc4] sm:$0xf]
  %v419 = vld [vmem:[%s1 + $0xc8] sm:$0xf]
  %v420 = vld [vmem:[%s1 + $0xcc] sm:$0xf]
  %v421 = vld [vmem:[%s1 + $0xd0] sm:$0xf]
  %v422 = vld [vmem:[%s1 + $0xd4] sm:$0xf]
  %v423 = vld [vmem:[%s1 + $0xd8] sm:$0xf]
  %v424 = vld [vmem:[%s1 + $0xdc] sm:$0xf]
  %v425 = vld [vmem:[%s1 + $0xe0] sm:$0xf]
  %v426 = vld [vmem:[%s1 + $0xe4] sm:$0xf]
  %v427 = vld [vmem:[%s1 + $0xe8] sm:$0xf]
  %v428 = vld [vmem:[%s1 + $0xec] sm:$0xf]
  %v429 = vld [vmem:[%s1 + $0xf0] sm:$0xf]
  %v430 = vld [vmem:[%s1 + $0xf4] sm:$0xf]
  %v431 = vld [vmem:[%s1 + $0xf8] sm:$0xf]
  %v432 = vld [vmem:[%s1 + $0xfc] sm:$0xf]
  %v433 = vld [vmem:[%s1 + $0x100] sm:$0xf]
  %v434 = vld [vmem:[%s1 + $0x104] sm:$0xf]
  %v435 = vld [vmem:[%s1 + $0x108] sm:$0xf]
  %v436 = vld [vmem:[%s1 + $0x10c] sm:$0xf]
  %v437 = vld [vmem:[%s1 + $0x110] sm:$0xf]
  %v438 = vld [vmem:[%s1 + $0x114] sm:$0xf]
  %v439 = vld [vmem:[%s1 + $0x118] sm:$0xf]
  %v440 = vld [vmem:[%s1 + $0x11c] sm:$0xf]
  %v441 = vld [vmem:[%s1 + $0x120] sm:$0xf]
  %v442 = vld [vmem:[%s1 + $0x124] sm:$0xf]
  %v443 = vld [vmem:[%s1 + $0x128] sm:$0xf]
  %v444 = vld [vmem:[%s1 + $0x12c] sm:$0xf]
  %v445 = vld [vmem:[%s1 + $0x130] sm:$0xf]
  %v446 = vld [vmem:[%s1 + $0x134] sm:$0xf]
  %v447 = vld [vmem:[%s1 + $0x138] sm:$0xf]
  %v448 = vld [vmem:[%s1 + $0x13c] sm:$0xf]
  %v449 = vld [vmem:[%s1 + $0x140] sm:$0xf]
  %v450 = vld [vmem:[%s1 + $0x144] sm:$0xf]
  %v451 = vld [vmem:[%s1 + $0x148] sm:$0xf]
  %v452 = vld [vmem:[%s1 + $0x14c] sm:$0xf]
  %v453 = vld [vmem:[%s1 + $0x150] sm:$0xf]
  %v454 = vld [vmem:[%s1 + $0x154] sm:$0xf]
  %v455 = vld [vmem:[%s1 + $0x158] sm:$0xf]
  %v456 = vld [vmem:[%s1 + $0x15c] sm:$0xf]
  %v457 = vld [vmem:[%s1 + $0x160] sm:$0xf]
  %v458 = vld [vmem:[%s1 + $0x164] sm:$0xf]
  %v459 = vld [vmem:[%s1 + $0x168] sm:$0xf]
  %v460 = vld [vmem:[%s1 + $0x16c] sm:$0xf]
  %v461 = vld [vmem:[%s1 + $0x170] sm:$0xf]
  %v462 = vld [vmem:[%s1 + $0x174] sm:$0xf]
  %v463 = vld [vmem:[%s1 + $0x178] sm:$0xf]
  %v464 = vld [vmem:[%s1 + $0x17c] sm:$0xf]
  %v465 = vld [vmem:[%s1 + $0x180] sm:$0xf]
  %v466 = vld [vmem:[%s1 + $0x184] sm:$0xf]
  %v467 = vld [vmem:[%s2] sm:$0x1]
  %v469 = vlaneseq
  %v470 = vshrl.u32 %v469, 7
  %v471 = vsub.s32 0, %v470
  %v472 = vrot.slane %v467, %v471
  %v572 = vunpack.c.l.b16 %v369
  %v573 = vunpack.c.l.b16 %v370
  %v574 = vunpack.c.l.b16 %v371
  %v575 = vunpack.c.l.b16 %v372
  %v576 = vunpack.c.l.b16 %v373
  %v577 = vunpack.c.l.b16 %v374
  %v578 = vunpack.c.l.b16 %v375
  %v579 = vunpack.c.l.b16 %v376
  %v580 = vunpack.c.l.b16 %v377
  %v581 = vunpack.c.l.b16 %v378
  %v582 = vunpack.c.l.b16 %v379
  %v583 = vunpack.c.l.b16 %v380
  %v584 = vunpack.c.l.b16 %v381
  %v585 = vunpack.c.l.b16 %v382
  %v586 = vunpack.c.l.b16 %v383
  %v587 = vunpack.c.l.b16 %v384
  %v588 = vunpack.c.l.b16 %v385
  %v589 = vunpack.c.l.b16 %v386
  %v590 = vunpack.c.l.b16 %v387
  %v591 = vunpack.c.l.b16 %v388
  %v592 = vunpack.c.l.b16 %v389
  %v593 = vunpack.c.l.b16 %v390
  %v594 = vunpack.c.l.b16 %v391
  %v595 = vunpack.c.l.b16 %v392
  %v596 = vunpack.c.l.b16 %v393
  %v597 = vunpack.c.l.b16 %v394
  %v598 = vunpack.c.l.b16 %v395
  %v599 = vunpack.c.l.b16 %v396
  %v600 = vunpack.c.l.b16 %v397
  %v601 = vunpack.c.l.b16 %v398
  %v602 = vunpack.c.l.b16 %v399
  %v603 = vunpack.c.l.b16 %v400
  %v604 = vunpack.c.l.b16 %v401
  %v605 = vunpack.c.l.b16 %v402
  %v606 = vunpack.c.l.b16 %v403
  %v607 = vunpack.c.l.b16 %v404
  %v608 = vunpack.c.l.b16 %v405
  %v609 = vunpack.c.l.b16 %v406
  %v610 = vunpack.c.l.b16 %v407
  %v611 = vunpack.c.l.b16 %v408
  %v612 = vunpack.c.l.b16 %v409
  %v613 = vunpack.c.l.b16 %v410
  %v614 = vunpack.c.l.b16 %v411
  %v615 = vunpack.c.l.b16 %v412
  %v616 = vunpack.c.l.b16 %v413
  %v617 = vunpack.c.l.b16 %v414
  %v618 = vunpack.c.l.b16 %v415
  %v619 = vunpack.c.l.b16 %v416
  %v620 = vunpack.c.l.b16 %v417
  %v621 = vunpack.c.l.b16 %v418
  %v622 = vunpack.c.l.b16 %v419
  %v623 = vunpack.c.l.b16 %v420
  %v624 = vunpack.c.l.b16 %v421
  %v625 = vunpack.c.l.b16 %v422
  %v626 = vunpack.c.l.b16 %v423
  %v627 = vunpack.c.l.b16 %v424
  %v628 = vunpack.c.l.b16 %v425
  %v629 = vunpack.c.l.b16 %v426
  %v630 = vunpack.c.l.b16 %v427
  %v631 = vunpack.c.l.b16 %v428
  %v632 = vunpack.c.l.b16 %v429
  %v633 = vunpack.c.l.b16 %v430
  %v634 = vunpack.c.l.b16 %v431
  %v635 = vunpack.c.l.b16 %v432
  %v636 = vunpack.c.l.b16 %v433
  %v637 = vunpack.c.l.b16 %v434
  %v638 = vunpack.c.l.b16 %v435
  %v639 = vunpack.c.l.b16 %v436
  %v640 = vunpack.c.l.b16 %v437
  %v641 = vunpack.c.l.b16 %v438
  %v642 = vunpack.c.l.b16 %v439
  %v643 = vunpack.c.l.b16 %v440
  %v644 = vunpack.c.l.b16 %v441
  %v645 = vunpack.c.l.b16 %v442
  %v646 = vunpack.c.l.b16 %v443
  %v647 = vunpack.c.l.b16 %v444
  %v648 = vunpack.c.l.b16 %v445
  %v649 = vunpack.c.l.b16 %v446
  %v650 = vunpack.c.l.b16 %v447
  %v651 = vunpack.c.l.b16 %v448
  %v652 = vunpack.c.l.b16 %v449
  %v653 = vunpack.c.l.b16 %v450
  %v654 = vunpack.c.l.b16 %v451
  %v655 = vunpack.c.l.b16 %v452
  %v656 = vunpack.c.l.b16 %v453
  %v657 = vunpack.c.l.b16 %v454
  %v658 = vunpack.c.l.b16 %v455
  %v659 = vunpack.c.l.b16 %v456
  %v660 = vunpack.c.l.b16 %v457
  %v661 = vunpack.c.l.b16 %v458
  %v662 = vunpack.c.l.b16 %v459
  %v663 = vunpack.c.l.b16 %v460
  %v664 = vunpack.c.l.b16 %v461
  %v665 = vunpack.c.l.b16 %v462
  %v666 = vunpack.c.l.b16 %v463
  %v667 = vunpack.c.l.b16 %v464
  %v668 = vunpack.c.l.b16 %v465
  %v669 = vunpack.c.l.b16 %v466
  %v670 = vpack.c.b16 %v573, %v572
  %v671 = vpack.c.b16 %v575, %v574
  %v672 = vpack.c.b16 %v577, %v576
  %v673 = vpack.c.b16 %v579, %v578
  %v674 = vpack.c.b16 %v581, %v580
  %v675 = vpack.c.b16 %v583, %v582
  %v676 = vpack.c.b16 %v585, %v584
  %v677 = vpack.c.b16 %v587, %v586
  %v678 = vpack.c.b16 %v589, %v588
  %v679 = vpack.c.b16 %v591, %v590
  %v680 = vpack.c.b16 %v593, %v592
  %v681 = vpack.c.b16 %v595, %v594
  %v682 = vpack.c.b16 %v597, %v596
  %v683 = vpack.c.b16 %v599, %v598
  %v684 = vpack.c.b16 %v601, %v600
  %v685 = vpack.c.b16 %v603, %v602
  %v686 = vpack.c.b16 %v605, %v604
  %v687 = vpack.c.b16 %v607, %v606
  %v688 = vpack.c.b16 %v609, %v608
  %v689 = vpack.c.b16 %v611, %v610
  %v690 = vpack.c.b16 %v613, %v612
  %v691 = vpack.c.b16 %v615, %v614
  %v692 = vpack.c.b16 %v617, %v616
  %v693 = vpack.c.b16 %v619, %v618
  %v694 = vpack.c.b16 %v621, %v620
  %v695 = vpack.c.b16 %v623, %v622
  %v696 = vpack.c.b16 %v625, %v624
  %v697 = vpack.c.b16 %v627, %v626
  %v698 = vpack.c.b16 %v629, %v628
  %v699 = vpack.c.b16 %v631, %v630
  %v700 = vpack.c.b16 %v633, %v632
  %v701 = vpack.c.b16 %v635, %v634
  %v702 = vpack.c.b16 %v637, %v636
  %v703 = vpack.c.b16 %v639, %v638
  %v704 = vpack.c.b16 %v641, %v640
  %v705 = vpack.c.b16 %v643, %v642
  %v706 = vpack.c.b16 %v645, %v644
  %v707 = vpack.c.b16 %v647, %v646
  %v708 = vpack.c.b16 %v649, %v648
  %v709 = vpack.c.b16 %v651, %v650
  %v710 = vpack.c.b16 %v653, %v652
  %v711 = vpack.c.b16 %v655, %v654
  %v712 = vpack.c.b16 %v657, %v656
  %v713 = vpack.c.b16 %v659, %v658
  %v714 = vpack.c.b16 %v661, %v660
  %v715 = vpack.c.b16 %v663, %v662
  %v716 = vpack.c.b16 %v665, %v664
  %v717 = vpack.c.b16 %v667, %v666
  %v718 = vpack.c.b16 %v669, %v668
  %vm768 = vcmask 130048
  %v770 = vsel %vm768, %v263, 0
  %v773 = vsel %vm768, %v270, 0
  %v776 = vsel %vm768, %v277, 0
  %v779 = vsel %vm768, %v284, 0
  %v782 = vsel %vm768, %v291, 0
  %v785 = vsel %vm768, %v298, 0
  %v788 = vsel %vm768, %v305, 0
  %v791 = vsel %vm768, %v312, 0
  %v794 = vsel %vm768, %v319, 0
  %v797 = vsel %vm768, %v326, 0
  %v800 = vsel %vm768, %v333, 0
  %v803 = vsel %vm768, %v340, 0
  %v806 = vsel %vm768, %v347, 0
  %v809 = vsel %vm768, %v354, 0
  %v812 = vsel %vm768, %v361, 0
  %v815 = vsel %vm768, %v368, 0
  %817 = vmatprep.subr.bf16.mxu0 0
  %818 = vmatpush1.bf16.msra.mxu0 %v677
  %819 = vmatprep.subr.bf16.mxu0 0
  %820 = vmatpush1.bf16.msra.mxu0 %v676
  %821 = vmatprep.subr.bf16.mxu0 0
  %822 = vmatpush1.bf16.msra.mxu0 %v675
  %823 = vmatprep.subr.bf16.mxu0 0
  %824 = vmatpush1.bf16.msra.mxu0 %v674
  %825 = vmatprep.subr.bf16.mxu0 0
  %826 = vmatpush1.bf16.msra.mxu0 %v673
  %827 = vmatprep.subr.bf16.mxu0 0
  %828 = vmatpush1.bf16.msra.mxu0 %v672
  %829 = vmatprep.subr.bf16.mxu0 0
  %830 = vmatpush1.bf16.msra.mxu0 %v671
  %831 = vmatprep.subr.bf16.mxu0 0
  %832 = vmatpush1.bf16.msra.mxu0 %v670
  %833 = vmatprep.subr.bf16.mxu0 0
  %834 = vmatpush2.bf16.msra.mxu0 %v685
  %835 = vmatprep.subr.bf16.mxu0 0
  %836 = vmatpush2.bf16.msra.mxu0 %v684
  %837 = vmatprep.subr.bf16.mxu0 0
  %838 = vmatpush2.bf16.msra.mxu0 %v683
  %839 = vmatprep.subr.bf16.mxu0 0
  %840 = vmatpush2.bf16.msra.mxu0 %v682
  %841 = vmatprep.subr.bf16.mxu0 0
  %842 = vmatpush2.bf16.msra.mxu0 %v681
  %843 = vmatprep.subr.bf16.mxu0 0
  %844 = vmatpush2.bf16.msra.mxu0 %v680
  %845 = vmatprep.subr.bf16.mxu0 0
  %846 = vmatpush2.bf16.msra.mxu0 %v679
  %847 = vmatprep.subr.bf16.mxu0 0
  %848 = vmatpush2.bf16.msra.mxu0 %v678
  %849 = vmatprep.mubr.bf16.mxu0 %v258
  %850 = vmatmul.mubr.bf16.gmra.mxu0 %v257
  %v851 = vpop.f32.mrf.mxu0
  %v852 = vadd.f32 %v472, %v851
  %v853 = vpop.f32.mrf.mxu0
  %v854 = vpop.f32.mrf.mxu0
  %v855 = vadd.f32 %v472, %v854
  %v856 = vpop.f32.mrf.mxu0
  %857 = vmatprep.mubr.bf16.mxu0 %v265
  %858 = vmatmul.mubr.bf16.gmra.mxu0 %v264
  %v859 = vpop.f32.mrf.mxu0
  %v860 = vadd.f32 %v472, %v859
  %v861 = vpop.f32.mrf.mxu0
  %v862 = vpop.f32.mrf.mxu0
  %v863 = vadd.f32 %v472, %v862
  %v864 = vpop.f32.mrf.mxu0
  %865 = vmatprep.mubr.bf16.mxu0 %v272
  %866 = vmatmul.mubr.bf16.gmra.mxu0 %v271
  %v867 = vpop.f32.mrf.mxu0
  %v868 = vadd.f32 %v472, %v867
  %v869 = vpop.f32.mrf.mxu0
  %v870 = vpop.f32.mrf.mxu0
  %v871 = vadd.f32 %v472, %v870
  %v872 = vpop.f32.mrf.mxu0
  %873 = vmatprep.mubr.bf16.mxu0 %v279
  %874 = vmatmul.mubr.bf16.gmra.mxu0 %v278
  %v875 = vpop.f32.mrf.mxu0
  %v876 = vadd.f32 %v472, %v875
  %v877 = vpop.f32.mrf.mxu0
  %v878 = vpop.f32.mrf.mxu0
  %v879 = vadd.f32 %v472, %v878
  %v880 = vpop.f32.mrf.mxu0
  %881 = vmatprep.mubr.bf16.mxu0 %v286
  %882 = vmatmul.mubr.bf16.gmra.mxu0 %v285
  %v883 = vpop.f32.mrf.mxu0
  %v884 = vadd.f32 %v472, %v883
  %v885 = vpop.f32.mrf.mxu0
  %v886 = vpop.f32.mrf.mxu0
  %v887 = vadd.f32 %v472, %v886
  %v888 = vpop.f32.mrf.mxu0
  %889 = vmatprep.mubr.bf16.mxu0 %v293
  %890 = vmatmul.mubr.bf16.gmra.mxu0 %v292
  %v891 = vpop.f32.mrf.mxu0
  %v892 = vadd.f32 %v472, %v891
  %v893 = vpop.f32.mrf.mxu0
  %v894 = vpop.f32.mrf.mxu0
  %v895 = vadd.f32 %v472, %v894
  %v896 = vpop.f32.mrf.mxu0
  %897 = vmatprep.mubr.bf16.mxu0 %v300
  %898 = vmatmul.mubr.bf16.gmra.mxu0 %v299
  %v899 = vpop.f32.mrf.mxu0
  %v900 = vadd.f32 %v472, %v899
  %v901 = vpop.f32.mrf.mxu0
  %v902 = vpop.f32.mrf.mxu0
  %v903 = vadd.f32 %v472, %v902
  %v904 = vpop.f32.mrf.mxu0
  %905 = vmatprep.mubr.bf16.mxu0 %v307
  %906 = vmatmul.mubr.bf16.gmra.mxu0 %v306
  %v907 = vpop.f32.mrf.mxu0
  %v908 = vadd.f32 %v472, %v907
  %v909 = vpop.f32.mrf.mxu0
  %v910 = vpop.f32.mrf.mxu0
  %v911 = vadd.f32 %v472, %v910
  %v912 = vpop.f32.mrf.mxu0
  %913 = vmatprep.mubr.bf16.mxu0 %v314
  %914 = vmatmul.mubr.bf16.gmra.mxu0 %v313
  %v915 = vpop.f32.mrf.mxu0
  %v916 = vadd.f32 %v472, %v915
  %v917 = vpop.f32.mrf.mxu0
  %v918 = vpop.f32.mrf.mxu0
  %v919 = vadd.f32 %v472, %v918
  %v920 = vpop.f32.mrf.mxu0
  %921 = vmatprep.mubr.bf16.mxu0 %v321
  %922 = vmatmul.mubr.bf16.gmra.mxu0 %v320
  %v923 = vpop.f32.mrf.mxu0
  %v924 = vadd.f32 %v472, %v923
  %v925 = vpop.f32.mrf.mxu0
  %v926 = vpop.f32.mrf.mxu0
  %v927 = vadd.f32 %v472, %v926
  %v928 = vpop.f32.mrf.mxu0
  %929 = vmatprep.mubr.bf16.mxu0 %v328
  %930 = vmatmul.mubr.bf16.gmra.mxu0 %v327
  %v931 = vpop.f32.mrf.mxu0
  %v932 = vadd.f32 %v472, %v931
  %v933 = vpop.f32.mrf.mxu0
  %v934 = vpop.f32.mrf.mxu0
  %v935 = vadd.f32 %v472, %v934
  %v936 = vpop.f32.mrf.mxu0
  %937 = vmatprep.mubr.bf16.mxu0 %v335
  %938 = vmatmul.mubr.bf16.gmra.mxu0 %v334
  %v939 = vpop.f32.mrf.mxu0
  %v940 = vadd.f32 %v472, %v939
  %v941 = vpop.f32.mrf.mxu0
  %v942 = vpop.f32.mrf.mxu0
  %v943 = vadd.f32 %v472, %v942
  %v944 = vpop.f32.mrf.mxu0
  %945 = vmatprep.mubr.bf16.mxu0 %v342
  %946 = vmatmul.mubr.bf16.gmra.mxu0 %v341
  %v947 = vpop.f32.mrf.mxu0
  %v948 = vadd.f32 %v472, %v947
  %v949 = vpop.f32.mrf.mxu0
  %v950 = vpop.f32.mrf.mxu0
  %v951 = vadd.f32 %v472, %v950
  %v952 = vpop.f32.mrf.mxu0
  %953 = vmatprep.mubr.bf16.mxu0 %v349
  %954 = vmatmul.mubr.bf16.gmra.mxu0 %v348
  %v955 = vpop.f32.mrf.mxu0
  %v956 = vadd.f32 %v472, %v955
  %v957 = vpop.f32.mrf.mxu0
  %v958 = vpop.f32.mrf.mxu0
  %v959 = vadd.f32 %v472, %v958
  %v960 = vpop.f32.mrf.mxu0
  %961 = vmatprep.mubr.bf16.mxu0 %v356
  %962 = vmatmul.mubr.bf16.gmra.mxu0 %v355
  %v963 = vpop.f32.mrf.mxu0
  %v964 = vadd.f32 %v472, %v963
  %v965 = vpop.f32.mrf.mxu0
  %v966 = vpop.f32.mrf.mxu0
  %v967 = vadd.f32 %v472, %v966
  %v968 = vpop.f32.mrf.mxu0
  %969 = vmatprep.mubr.bf16.mxu0 %v363
  %970 = vmatmul.mubr.bf16.gmra.mxu0 %v362
  %v971 = vpop.f32.mrf.mxu0
  %v972 = vadd.f32 %v472, %v971
  %v973 = vpop.f32.mrf.mxu0
  %v974 = vpop.f32.mrf.mxu0
  %v975 = vadd.f32 %v472, %v974
  %v976 = vpop.f32.mrf.mxu0
  %977 = vdwg.mxu0
  %978 = vmatprep.subr.bf16.mxu0 0
  %979 = vmatpush1.bf16.msra.mxu0 %v693
  %980 = vmatprep.subr.bf16.mxu0 0
  %981 = vmatpush1.bf16.msra.mxu0 %v692
  %982 = vmatprep.subr.bf16.mxu0 0
  %983 = vmatpush1.bf16.msra.mxu0 %v691
  %984 = vmatprep.subr.bf16.mxu0 0
  %985 = vmatpush1.bf16.msra.mxu0 %v690
  %986 = vmatprep.subr.bf16.mxu0 0
  %987 = vmatpush1.bf16.msra.mxu0 %v689
  %988 = vmatprep.subr.bf16.mxu0 0
  %989 = vmatpush1.bf16.msra.mxu0 %v688
  %990 = vmatprep.subr.bf16.mxu0 0
  %991 = vmatpush1.bf16.msra.mxu0 %v687
  %992 = vmatprep.subr.bf16.mxu0 0
  %993 = vmatpush1.bf16.msra.mxu0 %v686
  %994 = vmatprep.subr.bf16.mxu0 0
  %995 = vmatpush2.bf16.msra.mxu0 %v701
  %996 = vmatprep.subr.bf16.mxu0 0
  %997 = vmatpush2.bf16.msra.mxu0 %v700
  %998 = vmatprep.subr.bf16.mxu0 0
  %999 = vmatpush2.bf16.msra.mxu0 %v699
  %1000 = vmatprep.subr.bf16.mxu0 0
  %1001 = vmatpush2.bf16.msra.mxu0 %v698
  %1002 = vmatprep.subr.bf16.mxu0 0
  %1003 = vmatpush2.bf16.msra.mxu0 %v697
  %1004 = vmatprep.subr.bf16.mxu0 0
  %1005 = vmatpush2.bf16.msra.mxu0 %v696
  %1006 = vmatprep.subr.bf16.mxu0 0
  %1007 = vmatpush2.bf16.msra.mxu0 %v695
  %1008 = vmatprep.subr.bf16.mxu0 0
  %1009 = vmatpush2.bf16.msra.mxu0 %v694
  %1010 = vmatprep.mubr.bf16.mxu0 %v260
  %1011 = vmatmul.mubr.bf16.gmra.mxu0 %v259
  %v1012 = vpop.f32.mrf.mxu0
  %v1013 = vadd.f32 %v852, %v1012
  %v1014 = vpop.f32.mrf.mxu0
  %v1015 = vpop.f32.mrf.mxu0
  %v1016 = vadd.f32 %v855, %v1015
  %v1017 = vpop.f32.mrf.mxu0
  %1018 = vmatprep.mubr.bf16.mxu0 %v267
  %1019 = vmatmul.mubr.bf16.gmra.mxu0 %v266
  %v1020 = vpop.f32.mrf.mxu0
  %v1021 = vadd.f32 %v860, %v1020
  %v1022 = vpop.f32.mrf.mxu0
  %v1023 = vpop.f32.mrf.mxu0
  %v1024 = vadd.f32 %v863, %v1023
  %v1025 = vpop.f32.mrf.mxu0
  %1026 = vmatprep.mubr.bf16.mxu0 %v274
  %1027 = vmatmul.mubr.bf16.gmra.mxu0 %v273
  %v1028 = vpop.f32.mrf.mxu0
  %v1029 = vadd.f32 %v868, %v1028
  %v1030 = vpop.f32.mrf.mxu0
  %v1031 = vpop.f32.mrf.mxu0
  %v1032 = vadd.f32 %v871, %v1031
  %v1033 = vpop.f32.mrf.mxu0
  %1034 = vmatprep.mubr.bf16.mxu0 %v281
  %1035 = vmatmul.mubr.bf16.gmra.mxu0 %v280
  %v1036 = vpop.f32.mrf.mxu0
  %v1037 = vadd.f32 %v876, %v1036
  %v1038 = vpop.f32.mrf.mxu0
  %v1039 = vpop.f32.mrf.mxu0
  %v1040 = vadd.f32 %v879, %v1039
  %v1041 = vpop.f32.mrf.mxu0
  %1042 = vmatprep.mubr.bf16.mxu0 %v288
  %1043 = vmatmul.mubr.bf16.gmra.mxu0 %v287
  %v1044 = vpop.f32.mrf.mxu0
  %v1045 = vadd.f32 %v884, %v1044
  %v1046 = vpop.f32.mrf.mxu0
  %v1047 = vpop.f32.mrf.mxu0
  %v1048 = vadd.f32 %v887, %v1047
  %v1049 = vpop.f32.mrf.mxu0
  %1050 = vmatprep.mubr.bf16.mxu0 %v295
  %1051 = vmatmul.mubr.bf16.gmra.mxu0 %v294
  %v1052 = vpop.f32.mrf.mxu0
  %v1053 = vadd.f32 %v892, %v1052
  %v1054 = vpop.f32.mrf.mxu0
  %v1055 = vpop.f32.mrf.mxu0
  %v1056 = vadd.f32 %v895, %v1055
  %v1057 = vpop.f32.mrf.mxu0
  %1058 = vmatprep.mubr.bf16.mxu0 %v302
  %1059 = vmatmul.mubr.bf16.gmra.mxu0 %v301
  %v1060 = vpop.f32.mrf.mxu0
  %v1061 = vadd.f32 %v900, %v1060
  %v1062 = vpop.f32.mrf.mxu0
  %v1063 = vpop.f32.mrf.mxu0
  %v1064 = vadd.f32 %v903, %v1063
  %v1065 = vpop.f32.mrf.mxu0
  %1066 = vmatprep.mubr.bf16.mxu0 %v309
  %1067 = vmatmul.mubr.bf16.gmra.mxu0 %v308
  %v1068 = vpop.f32.mrf.mxu0
  %v1069 = vadd.f32 %v908, %v1068
  %v1070 = vpop.f32.mrf.mxu0
  %v1071 = vpop.f32.mrf.mxu0
  %v1072 = vadd.f32 %v911, %v1071
  %v1073 = vpop.f32.mrf.mxu0
  %1074 = vmatprep.mubr.bf16.mxu0 %v316
  %1075 = vmatmul.mubr.bf16.gmra.mxu0 %v315
  %v1076 = vpop.f32.mrf.mxu0
  %v1077 = vadd.f32 %v916, %v1076
  %v1078 = vpop.f32.mrf.mxu0
  %v1079 = vpop.f32.mrf.mxu0
  %v1080 = vadd.f32 %v919, %v1079
  %v1081 = vpop.f32.mrf.mxu0
  %1082 = vmatprep.mubr.bf16.mxu0 %v323
  %1083 = vmatmul.mubr.bf16.gmra.mxu0 %v322
  %v1084 = vpop.f32.mrf.mxu0
  %v1085 = vadd.f32 %v924, %v1084
  %v1086 = vpop.f32.mrf.mxu0
  %v1087 = vpop.f32.mrf.mxu0
  %v1088 = vadd.f32 %v927, %v1087
  %v1089 = vpop.f32.mrf.mxu0
  %1090 = vmatprep.mubr.bf16.mxu0 %v330
  %1091 = vmatmul.mubr.bf16.gmra.mxu0 %v329
  %v1092 = vpop.f32.mrf.mxu0
  %v1093 = vadd.f32 %v932, %v1092
  %v1094 = vpop.f32.mrf.mxu0
  %v1095 = vpop.f32.mrf.mxu0
  %v1096 = vadd.f32 %v935, %v1095
  %v1097 = vpop.f32.mrf.mxu0
  %1098 = vmatprep.mubr.bf16.mxu0 %v337
  %1099 = vmatmul.mubr.bf16.gmra.mxu0 %v336
  %v1100 = vpop.f32.mrf.mxu0
  %v1101 = vadd.f32 %v940, %v1100
  %v1102 = vpop.f32.mrf.mxu0
  %v1103 = vpop.f32.mrf.mxu0
  %v1104 = vadd.f32 %v943, %v1103
  %v1105 = vpop.f32.mrf.mxu0
  %1106 = vmatprep.mubr.bf16.mxu0 %v344
  %1107 = vmatmul.mubr.bf16.gmra.mxu0 %v343
  %v1108 = vpop.f32.mrf.mxu0
  %v1109 = vadd.f32 %v948, %v1108
  %v1110 = vpop.f32.mrf.mxu0
  %v1111 = vpop.f32.mrf.mxu0
  %v1112 = vadd.f32 %v951, %v1111
  %v1113 = vpop.f32.mrf.mxu0
  %1114 = vmatprep.mubr.bf16.mxu0 %v351
  %1115 = vmatmul.mubr.bf16.gmra.mxu0 %v350
  %v1116 = vpop.f32.mrf.mxu0
  %v1117 = vadd.f32 %v956, %v1116
  %v1118 = vpop.f32.mrf.mxu0
  %v1119 = vpop.f32.mrf.mxu0
  %v1120 = vadd.f32 %v959, %v1119
  %v1121 = vpop.f32.mrf.mxu0
  %1122 = vmatprep.mubr.bf16.mxu0 %v358
  %1123 = vmatmul.mubr.bf16.gmra.mxu0 %v357
  %v1124 = vpop.f32.mrf.mxu0
  %v1125 = vadd.f32 %v964, %v1124
  %v1126 = vpop.f32.mrf.mxu0
  %v1127 = vpop.f32.mrf.mxu0
  %v1128 = vadd.f32 %v967, %v1127
  %v1129 = vpop.f32.mrf.mxu0
  %1130 = vmatprep.mubr.bf16.mxu0 %v365
  %1131 = vmatmul.mubr.bf16.gmra.mxu0 %v364
  %v1132 = vpop.f32.mrf.mxu0
  %v1133 = vadd.f32 %v972, %v1132
  %v1134 = vpop.f32.mrf.mxu0
  %v1135 = vpop.f32.mrf.mxu0
  %v1136 = vadd.f32 %v975, %v1135
  %v1137 = vpop.f32.mrf.mxu0
  %1138 = vdwg.mxu0
  %1139 = vmatprep.subr.bf16.mxu0 0
  %1140 = vmatpush1.bf16.msra.mxu0 %v709
  %1141 = vmatprep.subr.bf16.mxu0 0
  %1142 = vmatpush1.bf16.msra.mxu0 %v708
  %1143 = vmatprep.subr.bf16.mxu0 0
  %1144 = vmatpush1.bf16.msra.mxu0 %v707
  %1145 = vmatprep.subr.bf16.mxu0 0
  %1146 = vmatpush1.bf16.msra.mxu0 %v706
  %1147 = vmatprep.subr.bf16.mxu0 0
  %1148 = vmatpush1.bf16.msra.mxu0 %v705
  %1149 = vmatprep.subr.bf16.mxu0 0
  %1150 = vmatpush1.bf16.msra.mxu0 %v704
  %1151 = vmatprep.subr.bf16.mxu0 0
  %1152 = vmatpush1.bf16.msra.mxu0 %v703
  %1153 = vmatprep.subr.bf16.mxu0 0
  %1154 = vmatpush1.bf16.msra.mxu0 %v702
  %1155 = vmatprep.subr.bf16.mxu0 0
  %1156 = vmatpush2.bf16.msra.mxu0 %v717
  %1157 = vmatprep.subr.bf16.mxu0 0
  %1158 = vmatpush2.bf16.msra.mxu0 %v716
  %1159 = vmatprep.subr.bf16.mxu0 0
  %1160 = vmatpush2.bf16.msra.mxu0 %v715
  %1161 = vmatprep.subr.bf16.mxu0 0
  %1162 = vmatpush2.bf16.msra.mxu0 %v714
  %1163 = vmatprep.subr.bf16.mxu0 0
  %1164 = vmatpush2.bf16.msra.mxu0 %v713
  %1165 = vmatprep.subr.bf16.mxu0 0
  %1166 = vmatpush2.bf16.msra.mxu0 %v712
  %1167 = vmatprep.subr.bf16.mxu0 0
  %1168 = vmatpush2.bf16.msra.mxu0 %v711
  %1169 = vmatprep.subr.bf16.mxu0 0
  %1170 = vmatpush2.bf16.msra.mxu0 %v710
  %1171 = vmatprep.mubr.bf16.mxu0 %v262
  %1172 = vmatmul.mubr.bf16.gmra.mxu0 %v261
  %v1173 = vpop.f32.mrf.mxu0
  %v1174 = vadd.f32 %v1013, %v1173
  %v1175 = vpop.f32.mrf.mxu0
  %v1176 = vpop.f32.mrf.mxu0
  %v1177 = vadd.f32 %v1016, %v1176
  %v1178 = vpop.f32.mrf.mxu0
  %1179 = vmatprep.mubr.bf16.mxu0 %v269
  %1180 = vmatmul.mubr.bf16.gmra.mxu0 %v268
  %v1181 = vpop.f32.mrf.mxu0
  %v1182 = vadd.f32 %v1021, %v1181
  %v1183 = vpop.f32.mrf.mxu0
  %v1184 = vpop.f32.mrf.mxu0
  %v1185 = vadd.f32 %v1024, %v1184
  %v1186 = vpop.f32.mrf.mxu0
  %1187 = vmatprep.mubr.bf16.mxu0 %v276
  %1188 = vmatmul.mubr.bf16.gmra.mxu0 %v275
  %v1189 = vpop.f32.mrf.mxu0
  %v1190 = vadd.f32 %v1029, %v1189
  %v1191 = vpop.f32.mrf.mxu0
  %v1192 = vpop.f32.mrf.mxu0
  %v1193 = vadd.f32 %v1032, %v1192
  %v1194 = vpop.f32.mrf.mxu0
  %1195 = vmatprep.mubr.bf16.mxu0 %v283
  %1196 = vmatmul.mubr.bf16.gmra.mxu0 %v282
  %v1197 = vpop.f32.mrf.mxu0
  %v1198 = vadd.f32 %v1037, %v1197
  %v1199 = vpop.f32.mrf.mxu0
  %v1200 = vpop.f32.mrf.mxu0
  %v1201 = vadd.f32 %v1040, %v1200
  %v1202 = vpop.f32.mrf.mxu0
  %1203 = vmatprep.mubr.bf16.mxu0 %v290
  %1204 = vmatmul.mubr.bf16.gmra.mxu0 %v289
  %v1205 = vpop.f32.mrf.mxu0
  %v1206 = vadd.f32 %v1045, %v1205
  %v1207 = vpop.f32.mrf.mxu0
  %v1208 = vpop.f32.mrf.mxu0
  %v1209 = vadd.f32 %v1048, %v1208
  %v1210 = vpop.f32.mrf.mxu0
  %1211 = vmatprep.mubr.bf16.mxu0 %v297
  %1212 = vmatmul.mubr.bf16.gmra.mxu0 %v296
  %v1213 = vpop.f32.mrf.mxu0
  %v1214 = vadd.f32 %v1053, %v1213
  %v1215 = vpop.f32.mrf.mxu0
  %v1216 = vpop.f32.mrf.mxu0
  %v1217 = vadd.f32 %v1056, %v1216
  %v1218 = vpop.f32.mrf.mxu0
  %1219 = vmatprep.mubr.bf16.mxu0 %v304
  %1220 = vmatmul.mubr.bf16.gmra.mxu0 %v303
  %v1221 = vpop.f32.mrf.mxu0
  %v1222 = vadd.f32 %v1061, %v1221
  %v1223 = vpop.f32.mrf.mxu0
  %v1224 = vpop.f32.mrf.mxu0
  %v1225 = vadd.f32 %v1064, %v1224
  %v1226 = vpop.f32.mrf.mxu0
  %1227 = vmatprep.mubr.bf16.mxu0 %v311
  %1228 = vmatmul.mubr.bf16.gmra.mxu0 %v310
  %v1229 = vpop.f32.mrf.mxu0
  %v1230 = vadd.f32 %v1069, %v1229
  %v1231 = vpop.f32.mrf.mxu0
  %v1232 = vpop.f32.mrf.mxu0
  %v1233 = vadd.f32 %v1072, %v1232
  %v1234 = vpop.f32.mrf.mxu0
  %1235 = vmatprep.mubr.bf16.mxu0 %v318
  %1236 = vmatmul.mubr.bf16.gmra.mxu0 %v317
  %v1237 = vpop.f32.mrf.mxu0
  %v1238 = vadd.f32 %v1077, %v1237
  %v1239 = vpop.f32.mrf.mxu0
  %v1240 = vpop.f32.mrf.mxu0
  %v1241 = vadd.f32 %v1080, %v1240
  %v1242 = vpop.f32.mrf.mxu0
  %1243 = vmatprep.mubr.bf16.mxu0 %v325
  %1244 = vmatmul.mubr.bf16.gmra.mxu0 %v324
  %v1245 = vpop.f32.mrf.mxu0
  %v1246 = vadd.f32 %v1085, %v1245
  %v1247 = vpop.f32.mrf.mxu0
  %v1248 = vpop.f32.mrf.mxu0
  %v1249 = vadd.f32 %v1088, %v1248
  %v1250 = vpop.f32.mrf.mxu0
  %1251 = vmatprep.mubr.bf16.mxu0 %v332
  %1252 = vmatmul.mubr.bf16.gmra.mxu0 %v331
  %v1253 = vpop.f32.mrf.mxu0
  %v1254 = vadd.f32 %v1093, %v1253
  %v1255 = vpop.f32.mrf.mxu0
  %v1256 = vpop.f32.mrf.mxu0
  %v1257 = vadd.f32 %v1096, %v1256
  %v1258 = vpop.f32.mrf.mxu0
  %1259 = vmatprep.mubr.bf16.mxu0 %v339
  %1260 = vmatmul.mubr.bf16.gmra.mxu0 %v338
  %v1261 = vpop.f32.mrf.mxu0
  %v1262 = vadd.f32 %v1101, %v1261
  %v1263 = vpop.f32.mrf.mxu0
  %v1264 = vpop.f32.mrf.mxu0
  %v1265 = vadd.f32 %v1104, %v1264
  %v1266 = vpop.f32.mrf.mxu0
  %1267 = vmatprep.mubr.bf16.mxu0 %v346
  %1268 = vmatmul.mubr.bf16.gmra.mxu0 %v345
  %v1269 = vpop.f32.mrf.mxu0
  %v1270 = vadd.f32 %v1109, %v1269
  %v1271 = vpop.f32.mrf.mxu0
  %v1272 = vpop.f32.mrf.mxu0
  %v1273 = vadd.f32 %v1112, %v1272
  %v1274 = vpop.f32.mrf.mxu0
  %1275 = vmatprep.mubr.bf16.mxu0 %v353
  %1276 = vmatmul.mubr.bf16.gmra.mxu0 %v352
  %v1277 = vpop.f32.mrf.mxu0
  %v1278 = vadd.f32 %v1117, %v1277
  %v1279 = vpop.f32.mrf.mxu0
  %v1280 = vpop.f32.mrf.mxu0
  %v1281 = vadd.f32 %v1120, %v1280
  %v1282 = vpop.f32.mrf.mxu0
  %1283 = vmatprep.mubr.bf16.mxu0 %v360
  %1284 = vmatmul.mubr.bf16.gmra.mxu0 %v359
  %v1285 = vpop.f32.mrf.mxu0
  %v1286 = vadd.f32 %v1125, %v1285
  %v1287 = vpop.f32.mrf.mxu0
  %v1288 = vpop.f32.mrf.mxu0
  %v1289 = vadd.f32 %v1128, %v1288
  %v1290 = vpop.f32.mrf.mxu0
  %1291 = vmatprep.mubr.bf16.mxu0 %v367
  %1292 = vmatmul.mubr.bf16.gmra.mxu0 %v366
  %v1293 = vpop.f32.mrf.mxu0
  %v1294 = vadd.f32 %v1133, %v1293
  %v1295 = vpop.f32.mrf.mxu0
  %v1296 = vpop.f32.mrf.mxu0
  %v1297 = vadd.f32 %v1136, %v1296
  %v1298 = vpop.f32.mrf.mxu0
  %1299 = vdwg.mxu0
  %1300 = vmatprep.subr.bf16.mxu0 0
  %1301 = vmatpush1.bf16.msra.mxu0 0
  %1302 = vmatprep.subr.bf16.mxu0 0
  %1303 = vmatpush1.bf16.msra.mxu0 0
  %1304 = vmatprep.subr.bf16.mxu0 0
  %1305 = vmatpush1.bf16.msra.mxu0 0
  %1306 = vmatprep.subr.bf16.mxu0 0
  %1307 = vmatpush1.bf16.msra.mxu0 0
  %1308 = vmatprep.subr.bf16.mxu0 0
  %1309 = vmatpush1.bf16.msra.mxu0 0
  %1310 = vmatprep.subr.bf16.mxu0 0
  %1311 = vmatpush1.bf16.msra.mxu0 0
  %1312 = vmatprep.subr.bf16.mxu0 0
  %1313 = vmatpush1.bf16.msra.mxu0 0
  %1314 = vmatprep.subr.bf16.mxu0 0
  %1315 = vmatpush1.bf16.msra.mxu0 %v718
  %1316 = vmatprep.subr.bf16.mxu0 0
  %1317 = vmatpush2.bf16.msra.mxu0 0
  %1318 = vmatprep.subr.bf16.mxu0 0
  %1319 = vmatpush2.bf16.msra.mxu0 0
  %1320 = vmatprep.subr.bf16.mxu0 0
  %1321 = vmatpush2.bf16.msra.mxu0 0
  %1322 = vmatprep.subr.bf16.mxu0 0
  %1323 = vmatpush2.bf16.msra.mxu0 0
  %1324 = vmatprep.subr.bf16.mxu0 0
  %1325 = vmatpush2.bf16.msra.mxu0 0
  %1326 = vmatprep.subr.bf16.mxu0 0
  %1327 = vmatpush2.bf16.msra.mxu0 0
  %1328 = vmatprep.subr.bf16.mxu0 0
  %1329 = vmatpush2.bf16.msra.mxu0 0
  %1330 = vmatprep.subr.bf16.mxu0 0
  %1331 = vmatpush2.bf16.msra.mxu0 0
  %1332 = vmatprep.mubr.bf16.mxu0 0
  %1333 = vmatmul.mubr.bf16.gmra.mxu0 %v770
  %v1334 = vpop.f32.mrf.mxu0
  %v1335 = vadd.f32 %v1174, %v1334
  %v1336 = vpop.f32.mrf.mxu0
  %v1337 = vpop.f32.mrf.mxu0
  %v1338 = vadd.f32 %v1177, %v1337
  %v1339 = vpop.f32.mrf.mxu0
  %1340 = vmatprep.mubr.bf16.mxu0 0
  %1341 = vmatmul.mubr.bf16.gmra.mxu0 %v773
  %v1342 = vpop.f32.mrf.mxu0
  %v1343 = vadd.f32 %v1182, %v1342
  %v1344 = vpop.f32.mrf.mxu0
  %v1345 = vpop.f32.mrf.mxu0
  %v1346 = vadd.f32 %v1185, %v1345
  %v1347 = vpop.f32.mrf.mxu0
  %1348 = vmatprep.mubr.bf16.mxu0 0
  %1349 = vmatmul.mubr.bf16.gmra.mxu0 %v776
  %v1350 = vpop.f32.mrf.mxu0
  %v1351 = vadd.f32 %v1190, %v1350
  %v1352 = vpop.f32.mrf.mxu0
  %v1353 = vpop.f32.mrf.mxu0
  %v1354 = vadd.f32 %v1193, %v1353
  %v1355 = vpop.f32.mrf.mxu0
  %1356 = vmatprep.mubr.bf16.mxu0 0
  %1357 = vmatmul.mubr.bf16.gmra.mxu0 %v779
  %v1358 = vpop.f32.mrf.mxu0
  %v1359 = vadd.f32 %v1198, %v1358
  %v1360 = vpop.f32.mrf.mxu0
  %v1361 = vpop.f32.mrf.mxu0
  %v1362 = vadd.f32 %v1201, %v1361
  %v1363 = vpop.f32.mrf.mxu0
  %1364 = vmatprep.mubr.bf16.mxu0 0
  %1365 = vmatmul.mubr.bf16.gmra.mxu0 %v782
  %v1366 = vpop.f32.mrf.mxu0
  %v1367 = vadd.f32 %v1206, %v1366
  %v1368 = vpop.f32.mrf.mxu0
  %v1369 = vpop.f32.mrf.mxu0
  %v1370 = vadd.f32 %v1209, %v1369
  %v1371 = vpop.f32.mrf.mxu0
  %1372 = vmatprep.mubr.bf16.mxu0 0
  %1373 = vmatmul.mubr.bf16.gmra.mxu0 %v785
  %v1374 = vpop.f32.mrf.mxu0
  %v1375 = vadd.f32 %v1214, %v1374
  %v1376 = vpop.f32.mrf.mxu0
  %v1377 = vpop.f32.mrf.mxu0
  %v1378 = vadd.f32 %v1217, %v1377
  %v1379 = vpop.f32.mrf.mxu0
  %1380 = vmatprep.mubr.bf16.mxu0 0
  %1381 = vmatmul.mubr.bf16.gmra.mxu0 %v788
  %v1382 = vpop.f32.mrf.mxu0
  %v1383 = vadd.f32 %v1222, %v1382
  %v1384 = vpop.f32.mrf.mxu0
  %v1385 = vpop.f32.mrf.mxu0
  %v1386 = vadd.f32 %v1225, %v1385
  %v1387 = vpop.f32.mrf.mxu0
  %1388 = vmatprep.mubr.bf16.mxu0 0
  %1389 = vmatmul.mubr.bf16.gmra.mxu0 %v791
  %v1390 = vpop.f32.mrf.mxu0
  %v1391 = vadd.f32 %v1230, %v1390
  %v1392 = vpop.f32.mrf.mxu0
  %v1393 = vpop.f32.mrf.mxu0
  %v1394 = vadd.f32 %v1233, %v1393
  %v1395 = vpop.f32.mrf.mxu0
  %1396 = vmatprep.mubr.bf16.mxu0 0
  %1397 = vmatmul.mubr.bf16.gmra.mxu0 %v794
  %v1398 = vpop.f32.mrf.mxu0
  %v1399 = vadd.f32 %v1238, %v1398
  %v1400 = vpop.f32.mrf.mxu0
  %v1401 = vpop.f32.mrf.mxu0
  %v1402 = vadd.f32 %v1241, %v1401
  %v1403 = vpop.f32.mrf.mxu0
  %1404 = vmatprep.mubr.bf16.mxu0 0
  %1405 = vmatmul.mubr.bf16.gmra.mxu0 %v797
  %v1406 = vpop.f32.mrf.mxu0
  %v1407 = vadd.f32 %v1246, %v1406
  %v1408 = vpop.f32.mrf.mxu0
  %v1409 = vpop.f32.mrf.mxu0
  %v1410 = vadd.f32 %v1249, %v1409
  %v1411 = vpop.f32.mrf.mxu0
  %1412 = vmatprep.mubr.bf16.mxu0 0
  %1413 = vmatmul.mubr.bf16.gmra.mxu0 %v800
  %v1414 = vpop.f32.mrf.mxu0
  %v1415 = vadd.f32 %v1254, %v1414
  %v1416 = vpop.f32.mrf.mxu0
  %v1417 = vpop.f32.mrf.mxu0
  %v1418 = vadd.f32 %v1257, %v1417
  %v1419 = vpop.f32.mrf.mxu0
  %1420 = vmatprep.mubr.bf16.mxu0 0
  %1421 = vmatmul.mubr.bf16.gmra.mxu0 %v803
  %v1422 = vpop.f32.mrf.mxu0
  %v1423 = vadd.f32 %v1262, %v1422
  %v1424 = vpop.f32.mrf.mxu0
  %v1425 = vpop.f32.mrf.mxu0
  %v1426 = vadd.f32 %v1265, %v1425
  %v1427 = vpop.f32.mrf.mxu0
  %1428 = vmatprep.mubr.bf16.mxu0 0
  %1429 = vmatmul.mubr.bf16.gmra.mxu0 %v806
  %v1430 = vpop.f32.mrf.mxu0
  %v1431 = vadd.f32 %v1270, %v1430
  %v1432 = vpop.f32.mrf.mxu0
  %v1433 = vpop.f32.mrf.mxu0
  %v1434 = vadd.f32 %v1273, %v1433
  %v1435 = vpop.f32.mrf.mxu0
  %1436 = vmatprep.mubr.bf16.mxu0 0
  %1437 = vmatmul.mubr.bf16.gmra.mxu0 %v809
  %v1438 = vpop.f32.mrf.mxu0
  %v1439 = vadd.f32 %v1278, %v1438
  %v1440 = vpop.f32.mrf.mxu0
  %v1441 = vpop.f32.mrf.mxu0
  %v1442 = vadd.f32 %v1281, %v1441
  %v1443 = vpop.f32.mrf.mxu0
  %1444 = vmatprep.mubr.bf16.mxu0 0
  %1445 = vmatmul.mubr.bf16.gmra.mxu0 %v812
  %v1446 = vpop.f32.mrf.mxu0
  %v1447 = vadd.f32 %v1286, %v1446
  %v1448 = vpop.f32.mrf.mxu0
  %v1449 = vpop.f32.mrf.mxu0
  %v1450 = vadd.f32 %v1289, %v1449
  %v1451 = vpop.f32.mrf.mxu0
  %1452 = vmatprep.mubr.bf16.mxu0 0
  %1453 = vmatmul.mubr.bf16.gmra.mxu0 %v815
  %v1454 = vpop.f32.mrf.mxu0
  %v1455 = vadd.f32 %v1294, %v1454
  %v1456 = vpop.f32.mrf.mxu0
  %v1457 = vpop.f32.mrf.mxu0
  %v1458 = vadd.f32 %v1297, %v1457
  %v1459 = vpop.f32.mrf.mxu0
  %1460 = vdwg.mxu0
  %v1461 = vmax.f32 %v1335, 0.0
  %v1462 = vmax.f32 %v1338, 0.0
  %v1463 = vmax.f32 %v1343, 0.0
  %v1464 = vmax.f32 %v1346, 0.0
  %v1465 = vmax.f32 %v1351, 0.0
  %v1466 = vmax.f32 %v1354, 0.0
  %v1467 = vmax.f32 %v1359, 0.0
  %v1468 = vmax.f32 %v1362, 0.0
  %v1469 = vmax.f32 %v1367, 0.0
  %v1470 = vmax.f32 %v1370, 0.0
  %v1471 = vmax.f32 %v1375, 0.0
  %v1472 = vmax.f32 %v1378, 0.0
  %v1473 = vmax.f32 %v1383, 0.0
  %v1474 = vmax.f32 %v1386, 0.0
  %v1475 = vmax.f32 %v1391, 0.0
  %v1476 = vmax.f32 %v1394, 0.0
  %v1477 = vmax.f32 %v1399, 0.0
  %v1478 = vmax.f32 %v1402, 0.0
  %v1479 = vmax.f32 %v1407, 0.0
  %v1480 = vmax.f32 %v1410, 0.0
  %v1481 = vmax.f32 %v1415, 0.0
  %v1482 = vmax.f32 %v1418, 0.0
  %v1483 = vmax.f32 %v1423, 0.0
  %v1484 = vmax.f32 %v1426, 0.0
  %v1485 = vmax.f32 %v1431, 0.0
  %v1486 = vmax.f32 %v1434, 0.0
  %v1487 = vmax.f32 %v1439, 0.0
  %v1488 = vmax.f32 %v1442, 0.0
  %v1489 = vmax.f32 %v1447, 0.0
  %v1490 = vmax.f32 %v1450, 0.0
  %v1491 = vmax.f32 %v1455, 0.0
  %v1492 = vmax.f32 %v1458, 0.0
  %v1493 = vpack.c.bf16 %v1462, %v1461
  %v1494 = vpack.c.bf16 %v1464, %v1463
  %v1495 = vpack.c.bf16 %v1466, %v1465
  %v1496 = vpack.c.bf16 %v1468, %v1467
  %v1497 = vpack.c.bf16 %v1470, %v1469
  %v1498 = vpack.c.bf16 %v1472, %v1471
  %v1499 = vpack.c.bf16 %v1474, %v1473
  %v1500 = vpack.c.bf16 %v1476, %v1475
  %v1501 = vpack.c.bf16 %v1478, %v1477
  %v1502 = vpack.c.bf16 %v1480, %v1479
  %v1503 = vpack.c.bf16 %v1482, %v1481
  %v1504 = vpack.c.bf16 %v1484, %v1483
  %v1505 = vpack.c.bf16 %v1486, %v1485
  %v1506 = vpack.c.bf16 %v1488, %v1487
  %v1507 = vpack.c.bf16 %v1490, %v1489
  %v1508 = vpack.c.bf16 %v1492, %v1491
  %v1509 = vld [vmem:[%s3] sm:$0xf]
  %v1510 = vld [vmem:[%s3 + $0x4] sm:$0xf]
  %v1511 = vld [vmem:[%s4] sm:$0x1]
  %v1513 = vlaneseq
  %v1514 = vshrl.u32 %v1513, 7
  %v1515 = vsub.s32 0, %v1514
  %v1516 = vrot.slane %v1511, %v1515
  %v1520 = vunpack.c.l.b16 %v1509
  %v1521 = vunpack.c.l.b16 %v1510
  %v1522 = vpack.c.b16 %v1521, %v1520
  %v1525 = vsel %vm768, %v1493, 0
  %v1528 = vsel %vm768, %v1494, 0
  %v1531 = vsel %vm768, %v1495, 0
  %v1534 = vsel %vm768, %v1496, 0
  %v1537 = vsel %vm768, %v1497, 0
  %v1540 = vsel %vm768, %v1498, 0
  %v1543 = vsel %vm768, %v1499, 0
  %v1546 = vsel %vm768, %v1500, 0
  %v1549 = vsel %vm768, %v1501, 0
  %v1552 = vsel %vm768, %v1502, 0
  %v1555 = vsel %vm768, %v1503, 0
  %v1558 = vsel %vm768, %v1504, 0
  %v1561 = vsel %vm768, %v1505, 0
  %v1564 = vsel %vm768, %v1506, 0
  %v1567 = vsel %vm768, %v1507, 0
  %v1570 = vsel %vm768, %v1508, 0
  %1572 = vmatprep.subr.bf16.mxu0 0
  %1573 = vmatpush1.bf16.msra.mxu0 0
  %1574 = vmatprep.subr.bf16.mxu0 0
  %1575 = vmatpush1.bf16.msra.mxu0 0
  %1576 = vmatprep.subr.bf16.mxu0 0
  %1577 = vmatpush1.bf16.msra.mxu0 0
  %1578 = vmatprep.subr.bf16.mxu0 0
  %1579 = vmatpush1.bf16.msra.mxu0 0
  %1580 = vmatprep.subr.bf16.mxu0 0
  %1581 = vmatpush1.bf16.msra.mxu0 0
  %1582 = vmatprep.subr.bf16.mxu0 0
  %1583 = vmatpush1.bf16.msra.mxu0 0
  %1584 = vmatprep.subr.bf16.mxu0 0
  %1585 = vmatpush1.bf16.msra.mxu0 0
  %1586 = vmatprep.subr.bf16.mxu0 0
  %1587 = vmatpush1.bf16.msra.mxu0 %v1522
  %1588 = vmatprep.subr.bf16.mxu0 0
  %1589 = vmatpush2.bf16.msra.mxu0 0
  %1590 = vmatprep.subr.bf16.mxu0 0
  %1591 = vmatpush2.bf16.msra.mxu0 0
  %1592 = vmatprep.subr.bf16.mxu0 0
  %1593 = vmatpush2.bf16.msra.mxu0 0
  %1594 = vmatprep.subr.bf16.mxu0 0
  %1595 = vmatpush2.bf16.msra.mxu0 0
  %1596 = vmatprep.subr.bf16.mxu0 0
  %1597 = vmatpush2.bf16.msra.mxu0 0
  %1598 = vmatprep.subr.bf16.mxu0 0
  %1599 = vmatpush2.bf16.msra.mxu0 0
  %1600 = vmatprep.subr.bf16.mxu0 0
  %1601 = vmatpush2.bf16.msra.mxu0 0
  %1602 = vmatprep.subr.bf16.mxu0 0
  %1603 = vmatpush2.bf16.msra.mxu0 0
  %1604 = vmatprep.mubr.bf16.mxu0 0
  %1605 = vmatmul.mubr.bf16.gmra.mxu0 %v1525
  %v1606 = vpop.f32.mrf.mxu0
  %v1607 = vadd.f32 %v1516, %v1606
  %v1608 = vpop.f32.mrf.mxu0
  %v1609 = vpop.f32.mrf.mxu0
  %v1610 = vadd.f32 %v1516, %v1609
  %v1611 = vpop.f32.mrf.mxu0
  %1612 = vmatprep.mubr.bf16.mxu0 0
  %1613 = vmatmul.mubr.bf16.gmra.mxu0 %v1528
  %v1614 = vpop.f32.mrf.mxu0
  %v1615 = vadd.f32 %v1516, %v1614
  %v1616 = vpop.f32.mrf.mxu0
  %v1617 = vpop.f32.mrf.mxu0
  %v1618 = vadd.f32 %v1516, %v1617
  %v1619 = vpop.f32.mrf.mxu0
  %1620 = vmatprep.mubr.bf16.mxu0 0
  %1621 = vmatmul.mubr.bf16.gmra.mxu0 %v1531
  %v1622 = vpop.f32.mrf.mxu0
  %v1623 = vadd.f32 %v1516, %v1622
  %v1624 = vpop.f32.mrf.mxu0
  %v1625 = vpop.f32.mrf.mxu0
  %v1626 = vadd.f32 %v1516, %v1625
  %v1627 = vpop.f32.mrf.mxu0
  %1628 = vmatprep.mubr.bf16.mxu0 0
  %1629 = vmatmul.mubr.bf16.gmra.mxu0 %v1534
  %v1630 = vpop.f32.mrf.mxu0
  %v1631 = vadd.f32 %v1516, %v1630
  %v1632 = vpop.f32.mrf.mxu0
  %v1633 = vpop.f32.mrf.mxu0
  %v1634 = vadd.f32 %v1516, %v1633
  %v1635 = vpop.f32.mrf.mxu0
  %1636 = vmatprep.mubr.bf16.mxu0 0
  %1637 = vmatmul.mubr.bf16.gmra.mxu0 %v1537
  %v1638 = vpop.f32.mrf.mxu0
  %v1639 = vadd.f32 %v1516, %v1638
  %v1640 = vpop.f32.mrf.mxu0
  %v1641 = vpop.f32.mrf.mxu0
  %v1642 = vadd.f32 %v1516, %v1641
  %v1643 = vpop.f32.mrf.mxu0
  %1644 = vmatprep.mubr.bf16.mxu0 0
  %1645 = vmatmul.mubr.bf16.gmra.mxu0 %v1540
  %v1646 = vpop.f32.mrf.mxu0
  %v1647 = vadd.f32 %v1516, %v1646
  %v1648 = vpop.f32.mrf.mxu0
  %v1649 = vpop.f32.mrf.mxu0
  %v1650 = vadd.f32 %v1516, %v1649
  %v1651 = vpop.f32.mrf.mxu0
  %1652 = vmatprep.mubr.bf16.mxu0 0
  %1653 = vmatmul.mubr.bf16.gmra.mxu0 %v1543
  %v1654 = vpop.f32.mrf.mxu0
  %v1655 = vadd.f32 %v1516, %v1654
  %v1656 = vpop.f32.mrf.mxu0
  %v1657 = vpop.f32.mrf.mxu0
  %v1658 = vadd.f32 %v1516, %v1657
  %v1659 = vpop.f32.mrf.mxu0
  %1660 = vmatprep.mubr.bf16.mxu0 0
  %1661 = vmatmul.mubr.bf16.gmra.mxu0 %v1546
  %v1662 = vpop.f32.mrf.mxu0
  %v1663 = vadd.f32 %v1516, %v1662
  %v1664 = vpop.f32.mrf.mxu0
  %v1665 = vpop.f32.mrf.mxu0
  %v1666 = vadd.f32 %v1516, %v1665
  %v1667 = vpop.f32.mrf.mxu0
  %1668 = vmatprep.mubr.bf16.mxu0 0
  %1669 = vmatmul.mubr.bf16.gmra.mxu0 %v1549
  %v1670 = vpop.f32.mrf.mxu0
  %v1671 = vadd.f32 %v1516, %v1670
  %v1672 = vpop.f32.mrf.mxu0
  %v1673 = vpop.f32.mrf.mxu0
  %v1674 = vadd.f32 %v1516, %v1673
  %v1675 = vpop.f32.mrf.mxu0
  %1676 = vmatprep.mubr.bf16.mxu0 0
  %1677 = vmatmul.mubr.bf16.gmra.mxu0 %v1552
  %v1678 = vpop.f32.mrf.mxu0
  %v1679 = vadd.f32 %v1516, %v1678
  %v1680 = vpop.f32.mrf.mxu0
  %v1681 = vpop.f32.mrf.mxu0
  %v1682 = vadd.f32 %v1516, %v1681
  %v1683 = vpop.f32.mrf.mxu0
  %1684 = vmatprep.mubr.bf16.mxu0 0
  %1685 = vmatmul.mubr.bf16.gmra.mxu0 %v1555
  %v1686 = vpop.f32.mrf.mxu0
  %v1687 = vadd.f32 %v1516, %v1686
  %v1688 = vpop.f32.mrf.mxu0
  %v1689 = vpop.f32.mrf.mxu0
  %v1690 = vadd.f32 %v1516, %v1689
  %v1691 = vpop.f32.mrf.mxu0
  %1692 = vmatprep.mubr.bf16.mxu0 0
  %1693 = vmatmul.mubr.bf16.gmra.mxu0 %v1558
  %v1694 = vpop.f32.mrf.mxu0
  %v1695 = vadd.f32 %v1516, %v1694
  %v1696 = vpop.f32.mrf.mxu0
  %v1697 = vpop.f32.mrf.mxu0
  %v1698 = vadd.f32 %v1516, %v1697
  %v1699 = vpop.f32.mrf.mxu0
  %1700 = vmatprep.mubr.bf16.mxu0 0
  %1701 = vmatmul.mubr.bf16.gmra.mxu0 %v1561
  %v1702 = vpop.f32.mrf.mxu0
  %v1703 = vadd.f32 %v1516, %v1702
  %v1704 = vpop.f32.mrf.mxu0
  %v1705 = vpop.f32.mrf.mxu0
  %v1706 = vadd.f32 %v1516, %v1705
  %v1707 = vpop.f32.mrf.mxu0
  %1708 = vmatprep.mubr.bf16.mxu0 0
  %1709 = vmatmul.mubr.bf16.gmra.mxu0 %v1564
  %v1710 = vpop.f32.mrf.mxu0
  %v1711 = vadd.f32 %v1516, %v1710
  %v1712 = vpop.f32.mrf.mxu0
  %v1713 = vpop.f32.mrf.mxu0
  %v1714 = vadd.f32 %v1516, %v1713
  %v1715 = vpop.f32.mrf.mxu0
  %1716 = vmatprep.mubr.bf16.mxu0 0
  %1717 = vmatmul.mubr.bf16.gmra.mxu0 %v1567
  %v1718 = vpop.f32.mrf.mxu0
  %v1719 = vadd.f32 %v1516, %v1718
  %v1720 = vpop.f32.mrf.mxu0
  %v1721 = vpop.f32.mrf.mxu0
  %v1722 = vadd.f32 %v1516, %v1721
  %v1723 = vpop.f32.mrf.mxu0
  %1724 = vmatprep.mubr.bf16.mxu0 0
  %1725 = vmatmul.mubr.bf16.gmra.mxu0 %v1570
  %v1726 = vpop.f32.mrf.mxu0
  %v1727 = vadd.f32 %v1516, %v1726
  %v1728 = vpop.f32.mrf.mxu0
  %v1729 = vpop.f32.mrf.mxu0
  %v1730 = vadd.f32 %v1516, %v1729
  %v1731 = vpop.f32.mrf.mxu0
  %1732 = vdwg.mxu0
  %v1733 = vmax.f32 %v1607, 0.0
  %v1734 = vmax.f32 %v1610, 0.0
  %v1735 = vmax.f32 %v1615, 0.0
  %v1736 = vmax.f32 %v1618, 0.0
  %v1737 = vmax.f32 %v1623, 0.0
  %v1738 = vmax.f32 %v1626, 0.0
  %v1739 = vmax.f32 %v1631, 0.0
  %v1740 = vmax.f32 %v1634, 0.0
  %v1741 = vmax.f32 %v1639, 0.0
  %v1742 = vmax.f32 %v1642, 0.0
  %v1743 = vmax.f32 %v1647, 0.0
  %v1744 = vmax.f32 %v1650, 0.0
  %v1745 = vmax.f32 %v1655, 0.0
  %v1746 = vmax.f32 %v1658, 0.0
  %v1747 = vmax.f32 %v1663, 0.0
  %v1748 = vmax.f32 %v1666, 0.0
  %v1749 = vmax.f32 %v1671, 0.0
  %v1750 = vmax.f32 %v1674, 0.0
  %v1751 = vmax.f32 %v1679, 0.0
  %v1752 = vmax.f32 %v1682, 0.0
  %v1753 = vmax.f32 %v1687, 0.0
  %v1754 = vmax.f32 %v1690, 0.0
  %v1755 = vmax.f32 %v1695, 0.0
  %v1756 = vmax.f32 %v1698, 0.0
  %v1757 = vmax.f32 %v1703, 0.0
  %v1758 = vmax.f32 %v1706, 0.0
  %v1759 = vmax.f32 %v1711, 0.0
  %v1760 = vmax.f32 %v1714, 0.0
  %v1761 = vmax.f32 %v1719, 0.0
  %v1762 = vmax.f32 %v1722, 0.0
  %v1763 = vmax.f32 %v1727, 0.0
  %v1764 = vmax.f32 %v1730, 0.0
  %v1765 = vpack.c.bf16 %v1734, %v1733
  %v1766 = vpack.c.bf16 %v1736, %v1735
  %v1767 = vpack.c.bf16 %v1738, %v1737
  %v1768 = vpack.c.bf16 %v1740, %v1739
  %v1769 = vpack.c.bf16 %v1742, %v1741
  %v1770 = vpack.c.bf16 %v1744, %v1743
  %v1771 = vpack.c.bf16 %v1746, %v1745
  %v1772 = vpack.c.bf16 %v1748, %v1747
  %v1773 = vpack.c.bf16 %v1750, %v1749
  %v1774 = vpack.c.bf16 %v1752, %v1751
  %v1775 = vpack.c.bf16 %v1754, %v1753
  %v1776 = vpack.c.bf16 %v1756, %v1755
  %v1777 = vpack.c.bf16 %v1758, %v1757
  %v1778 = vpack.c.bf16 %v1760, %v1759
  %v1779 = vpack.c.bf16 %v1762, %v1761
  %v1780 = vpack.c.bf16 %v1764, %v1763
  %v1781 = vld [vmem:[%s5] sm:$0xf]
  %v1782 = vld [vmem:[%s5 + $0x4] sm:$0xf]
  %v1783 = vld [vmem:[%s6] sm:$0x1]
  %v1785 = vlaneseq
  %v1786 = vshrl.u32 %v1785, 7
  %v1787 = vsub.s32 0, %v1786
  %v1788 = vrot.slane %v1783, %v1787
  %v1792 = vunpack.c.l.b16 %v1781
  %v1793 = vunpack.c.l.b16 %v1782
  %v1794 = vpack.c.b16 %v1793, %v1792
  %v1797 = vsel %vm768, %v1765, 0
  %v1800 = vsel %vm768, %v1766, 0
  %v1803 = vsel %vm768, %v1767, 0
  %v1806 = vsel %vm768, %v1768, 0
  %v1809 = vsel %vm768, %v1769, 0
  %v1812 = vsel %vm768, %v1770, 0
  %v1815 = vsel %vm768, %v1771, 0
  %v1818 = vsel %vm768, %v1772, 0
  %v1821 = vsel %vm768, %v1773, 0
  %v1824 = vsel %vm768, %v1774, 0
  %v1827 = vsel %vm768, %v1775, 0
  %v1830 = vsel %vm768, %v1776, 0
  %v1833 = vsel %vm768, %v1777, 0
  %v1836 = vsel %vm768, %v1778, 0
  %v1839 = vsel %vm768, %v1779, 0
  %v1842 = vsel %vm768, %v1780, 0
  %1844 = vmatprep.subr.bf16.mxu0 0
  %1845 = vmatpush1.bf16.msra.mxu0 0
  %1846 = vmatprep.subr.bf16.mxu0 0
  %1847 = vmatpush1.bf16.msra.mxu0 0
  %1848 = vmatprep.subr.bf16.mxu0 0
  %1849 = vmatpush1.bf16.msra.mxu0 0
  %1850 = vmatprep.subr.bf16.mxu0 0
  %1851 = vmatpush1.bf16.msra.mxu0 0
  %1852 = vmatprep.subr.bf16.mxu0 0
  %1853 = vmatpush1.bf16.msra.mxu0 0
  %1854 = vmatprep.subr.bf16.mxu0 0
  %1855 = vmatpush1.bf16.msra.mxu0 0
  %1856 = vmatprep.subr.bf16.mxu0 0
  %1857 = vmatpush1.bf16.msra.mxu0 0
  %1858 = vmatprep.subr.bf16.mxu0 0
  %1859 = vmatpush1.bf16.msra.mxu0 %v1794
  %1860 = vmatprep.subr.bf16.mxu0 0
  %1861 = vmatpush2.bf16.msra.mxu0 0
  %1862 = vmatprep.subr.bf16.mxu0 0
  %1863 = vmatpush2.bf16.msra.mxu0 0
  %1864 = vmatprep.subr.bf16.mxu0 0
  %1865 = vmatpush2.bf16.msra.mxu0 0
  %1866 = vmatprep.subr.bf16.mxu0 0
  %1867 = vmatpush2.bf16.msra.mxu0 0
  %1868 = vmatprep.subr.bf16.mxu0 0
  %1869 = vmatpush2.bf16.msra.mxu0 0
  %1870 = vmatprep.subr.bf16.mxu0 0
  %1871 = vmatpush2.bf16.msra.mxu0 0
  %1872 = vmatprep.subr.bf16.mxu0 0
  %1873 = vmatpush2.bf16.msra.mxu0 0
  %1874 = vmatprep.subr.bf16.mxu0 0
  %1875 = vmatpush2.bf16.msra.mxu0 0
  %1876 = vmatprep.mubr.bf16.mxu0 0
  %1877 = vmatmul.mubr.bf16.gmra.mxu0 %v1797
  %v1878 = vpop.f32.mrf.mxu0
  %v1879 = vadd.f32 %v1788, %v1878
  %v1880 = vpop.f32.mrf.mxu0
  %v1881 = vpop.f32.mrf.mxu0
  %v1882 = vadd.f32 %v1788, %v1881
  %v1883 = vpop.f32.mrf.mxu0
  %1884 = vmatprep.mubr.bf16.mxu0 0
  %1885 = vmatmul.mubr.bf16.gmra.mxu0 %v1800
  %v1886 = vpop.f32.mrf.mxu0
  %v1887 = vadd.f32 %v1788, %v1886
  %v1888 = vpop.f32.mrf.mxu0
  %v1889 = vpop.f32.mrf.mxu0
  %v1890 = vadd.f32 %v1788, %v1889
  %v1891 = vpop.f32.mrf.mxu0
  %1892 = vmatprep.mubr.bf16.mxu0 0
  %1893 = vmatmul.mubr.bf16.gmra.mxu0 %v1803
  %v1894 = vpop.f32.mrf.mxu0
  %v1895 = vadd.f32 %v1788, %v1894
  %v1896 = vpop.f32.mrf.mxu0
  %v1897 = vpop.f32.mrf.mxu0
  %v1898 = vadd.f32 %v1788, %v1897
  %v1899 = vpop.f32.mrf.mxu0
  %1900 = vmatprep.mubr.bf16.mxu0 0
  %1901 = vmatmul.mubr.bf16.gmra.mxu0 %v1806
  %v1902 = vpop.f32.mrf.mxu0
  %v1903 = vadd.f32 %v1788, %v1902
  %v1904 = vpop.f32.mrf.mxu0
  %v1905 = vpop.f32.mrf.mxu0
  %v1906 = vadd.f32 %v1788, %v1905
  %v1907 = vpop.f32.mrf.mxu0
  %1908 = vmatprep.mubr.bf16.mxu0 0
  %1909 = vmatmul.mubr.bf16.gmra.mxu0 %v1809
  %v1910 = vpop.f32.mrf.mxu0
  %v1911 = vadd.f32 %v1788, %v1910
  %v1912 = vpop.f32.mrf.mxu0
  %v1913 = vpop.f32.mrf.mxu0
  %v1914 = vadd.f32 %v1788, %v1913
  %v1915 = vpop.f32.mrf.mxu0
  %1916 = vmatprep.mubr.bf16.mxu0 0
  %1917 = vmatmul.mubr.bf16.gmra.mxu0 %v1812
  %v1918 = vpop.f32.mrf.mxu0
  %v1919 = vadd.f32 %v1788, %v1918
  %v1920 = vpop.f32.mrf.mxu0
  %v1921 = vpop.f32.mrf.mxu0
  %v1922 = vadd.f32 %v1788, %v1921
  %v1923 = vpop.f32.mrf.mxu0
  %1924 = vmatprep.mubr.bf16.mxu0 0
  %1925 = vmatmul.mubr.bf16.gmra.mxu0 %v1815
  %v1926 = vpop.f32.mrf.mxu0
  %v1927 = vadd.f32 %v1788, %v1926
  %v1928 = vpop.f32.mrf.mxu0
  %v1929 = vpop.f32.mrf.mxu0
  %v1930 = vadd.f32 %v1788, %v1929
  %v1931 = vpop.f32.mrf.mxu0
  %1932 = vmatprep.mubr.bf16.mxu0 0
  %1933 = vmatmul.mubr.bf16.gmra.mxu0 %v1818
  %v1934 = vpop.f32.mrf.mxu0
  %v1935 = vadd.f32 %v1788, %v1934
  %v1936 = vpop.f32.mrf.mxu0
  %v1937 = vpop.f32.mrf.mxu0
  %v1938 = vadd.f32 %v1788, %v1937
  %v1939 = vpop.f32.mrf.mxu0
  %1940 = vmatprep.mubr.bf16.mxu0 0
  %1941 = vmatmul.mubr.bf16.gmra.mxu0 %v1821
  %v1942 = vpop.f32.mrf.mxu0
  %v1943 = vadd.f32 %v1788, %v1942
  %v1944 = vpop.f32.mrf.mxu0
  %v1945 = vpop.f32.mrf.mxu0
  %v1946 = vadd.f32 %v1788, %v1945
  %v1947 = vpop.f32.mrf.mxu0
  %1948 = vmatprep.mubr.bf16.mxu0 0
  %1949 = vmatmul.mubr.bf16.gmra.mxu0 %v1824
  %v1950 = vpop.f32.mrf.mxu0
  %v1951 = vadd.f32 %v1788, %v1950
  %v1952 = vpop.f32.mrf.mxu0
  %v1953 = vpop.f32.mrf.mxu0
  %v1954 = vadd.f32 %v1788, %v1953
  %v1955 = vpop.f32.mrf.mxu0
  %1956 = vmatprep.mubr.bf16.mxu0 0
  %1957 = vmatmul.mubr.bf16.gmra.mxu0 %v1827
  %v1958 = vpop.f32.mrf.mxu0
  %v1959 = vadd.f32 %v1788, %v1958
  %v1960 = vpop.f32.mrf.mxu0
  %v1961 = vpop.f32.mrf.mxu0
  %v1962 = vadd.f32 %v1788, %v1961
  %v1963 = vpop.f32.mrf.mxu0
  %1964 = vmatprep.mubr.bf16.mxu0 0
  %1965 = vmatmul.mubr.bf16.gmra.mxu0 %v1830
  %v1966 = vpop.f32.mrf.mxu0
  %v1967 = vadd.f32 %v1788, %v1966
  %v1968 = vpop.f32.mrf.mxu0
  %v1969 = vpop.f32.mrf.mxu0
  %v1970 = vadd.f32 %v1788, %v1969
  %v1971 = vpop.f32.mrf.mxu0
  %1972 = vmatprep.mubr.bf16.mxu0 0
  %1973 = vmatmul.mubr.bf16.gmra.mxu0 %v1833
  %v1974 = vpop.f32.mrf.mxu0
  %v1975 = vadd.f32 %v1788, %v1974
  %v1976 = vpop.f32.mrf.mxu0
  %v1977 = vpop.f32.mrf.mxu0
  %v1978 = vadd.f32 %v1788, %v1977
  %v1979 = vpop.f32.mrf.mxu0
  %1980 = vmatprep.mubr.bf16.mxu0 0
  %1981 = vmatmul.mubr.bf16.gmra.mxu0 %v1836
  %v1982 = vpop.f32.mrf.mxu0
  %v1983 = vadd.f32 %v1788, %v1982
  %v1984 = vpop.f32.mrf.mxu0
  %v1985 = vpop.f32.mrf.mxu0
  %v1986 = vadd.f32 %v1788, %v1985
  %v1987 = vpop.f32.mrf.mxu0
  %1988 = vmatprep.mubr.bf16.mxu0 0
  %1989 = vmatmul.mubr.bf16.gmra.mxu0 %v1839
  %v1990 = vpop.f32.mrf.mxu0
  %v1991 = vadd.f32 %v1788, %v1990
  %v1992 = vpop.f32.mrf.mxu0
  %v1993 = vpop.f32.mrf.mxu0
  %v1994 = vadd.f32 %v1788, %v1993
  %v1995 = vpop.f32.mrf.mxu0
  %1996 = vmatprep.mubr.bf16.mxu0 0
  %1997 = vmatmul.mubr.bf16.gmra.mxu0 %v1842
  %v1998 = vpop.f32.mrf.mxu0
  %v1999 = vadd.f32 %v1788, %v1998
  %v2000 = vpop.f32.mrf.mxu0
  %v2001 = vpop.f32.mrf.mxu0
  %v2002 = vadd.f32 %v1788, %v2001
  %v2003 = vpop.f32.mrf.mxu0
  %2004 = vdwg.mxu0
  %v2005 = vmax.f32 %v1879, 0.0
  %v2006 = vmax.f32 %v1882, 0.0
  %v2007 = vmax.f32 %v1887, 0.0
  %v2008 = vmax.f32 %v1890, 0.0
  %v2009 = vmax.f32 %v1895, 0.0
  %v2010 = vmax.f32 %v1898, 0.0
  %v2011 = vmax.f32 %v1903, 0.0
  %v2012 = vmax.f32 %v1906, 0.0
  %v2013 = vmax.f32 %v1911, 0.0
  %v2014 = vmax.f32 %v1914, 0.0
  %v2015 = vmax.f32 %v1919, 0.0
  %v2016 = vmax.f32 %v1922, 0.0
  %v2017 = vmax.f32 %v1927, 0.0
  %v2018 = vmax.f32 %v1930, 0.0
  %v2019 = vmax.f32 %v1935, 0.0
  %v2020 = vmax.f32 %v1938, 0.0
  %v2021 = vmax.f32 %v1943, 0.0
  %v2022 = vmax.f32 %v1946, 0.0
  %v2023 = vmax.f32 %v1951, 0.0
  %v2024 = vmax.f32 %v1954, 0.0
  %v2025 = vmax.f32 %v1959, 0.0
  %v2026 = vmax.f32 %v1962, 0.0
  %v2027 = vmax.f32 %v1967, 0.0
  %v2028 = vmax.f32 %v1970, 0.0
  %v2029 = vmax.f32 %v1975, 0.0
  %v2030 = vmax.f32 %v1978, 0.0
  %v2031 = vmax.f32 %v1983, 0.0
  %v2032 = vmax.f32 %v1986, 0.0
  %v2033 = vmax.f32 %v1991, 0.0
  %v2034 = vmax.f32 %v1994, 0.0
  %v2035 = vmax.f32 %v1999, 0.0
  %v2036 = vmax.f32 %v2002, 0.0
  %v2037 = vpack.c.bf16 %v2006, %v2005
  %v2038 = vpack.c.bf16 %v2008, %v2007
  %v2039 = vpack.c.bf16 %v2010, %v2009
  %v2040 = vpack.c.bf16 %v2012, %v2011
  %v2041 = vpack.c.bf16 %v2014, %v2013
  %v2042 = vpack.c.bf16 %v2016, %v2015
  %v2043 = vpack.c.bf16 %v2018, %v2017
  %v2044 = vpack.c.bf16 %v2020, %v2019
  %v2045 = vpack.c.bf16 %v2022, %v2021
  %v2046 = vpack.c.bf16 %v2024, %v2023
  %v2047 = vpack.c.bf16 %v2026, %v2025
  %v2048 = vpack.c.bf16 %v2028, %v2027
  %v2049 = vpack.c.bf16 %v2030, %v2029
  %v2050 = vpack.c.bf16 %v2032, %v2031
  %v2051 = vpack.c.bf16 %v2034, %v2033
  %v2052 = vpack.c.bf16 %v2036, %v2035
  %v2053 = vld [vmem:[%s7] sm:$0xf]
  %v2054 = vld [vmem:[%s7 + $0x4] sm:$0x1]
  %v2055 = vld [vmem:[%s8] sm:$0x1]
  %v2057 = vlaneseq
  %v2058 = vshrl.u32 %v2057, 7
  %v2059 = vsub.s32 0, %v2058
  %v2060 = vrot.slane %v2055, %v2059
  %v2064 = vunpack.c.l.b16 %v2053
  %v2065 = vunpack.c.l.b16 %v2054
  %v2066 = vpack.c.b16 %v2065, %v2064
  %vm2067 = vcmask 80896
  %v2069 = vsel %vm2067, %v2037, 0
  %v2072 = vsel %vm2067, %v2038, 0
  %v2075 = vsel %vm2067, %v2039, 0
  %v2078 = vsel %vm2067, %v2040, 0
  %v2081 = vsel %vm2067, %v2041, 0
  %v2084 = vsel %vm2067, %v2042, 0
  %v2087 = vsel %vm2067, %v2043, 0
  %v2090 = vsel %vm2067, %v2044, 0
  %v2093 = vsel %vm2067, %v2045, 0
  %v2096 = vsel %vm2067, %v2046, 0
  %v2099 = vsel %vm2067, %v2047, 0
  %v2102 = vsel %vm2067, %v2048, 0
  %v2105 = vsel %vm2067, %v2049, 0
  %v2108 = vsel %vm2067, %v2050, 0
  %v2111 = vsel %vm2067, %v2051, 0
  %v2114 = vsel %vm2067, %v2052, 0
  %vm2116 = vcmask 1044480
  %v2118 = vsel %vm2116, %v2066, 0
  %2120 = vmatprep.subr.bf16.mxu0 0
  %2121 = vmatpush1.bf16.msra.mxu0 0
  %2122 = vmatprep.subr.bf16.mxu0 0
  %2123 = vmatpush1.bf16.msra.mxu0 0
  %2124 = vmatprep.subr.bf16.mxu0 0
  %2125 = vmatpush1.bf16.msra.mxu0 0
  %2126 = vmatprep.subr.bf16.mxu0 0
  %2127 = vmatpush1.bf16.msra.mxu0 0
  %2128 = vmatprep.subr.bf16.mxu0 0
  %2129 = vmatpush1.bf16.msra.mxu0 0
  %2130 = vmatprep.subr.bf16.mxu0 0
  %2131 = vmatpush1.bf16.msra.mxu0 0
  %2132 = vmatprep.subr.bf16.mxu0 0
  %2133 = vmatpush1.bf16.msra.mxu0 0
  %2134 = vmatprep.subr.bf16.mxu0 0
  %2135 = vmatpush1.bf16.msra.mxu0 %v2118
  %2136 = vmatprep.subr.bf16.mxu0 0
  %2137 = vmatpush2.bf16.msra.mxu0 0
  %2138 = vmatprep.subr.bf16.mxu0 0
  %2139 = vmatpush2.bf16.msra.mxu0 0
  %2140 = vmatprep.subr.bf16.mxu0 0
  %2141 = vmatpush2.bf16.msra.mxu0 0
  %2142 = vmatprep.subr.bf16.mxu0 0
  %2143 = vmatpush2.bf16.msra.mxu0 0
  %2144 = vmatprep.subr.bf16.mxu0 0
  %2145 = vmatpush2.bf16.msra.mxu0 0
  %2146 = vmatprep.subr.bf16.mxu0 0
  %2147 = vmatpush2.bf16.msra.mxu0 0
  %2148 = vmatprep.subr.bf16.mxu0 0
  %2149 = vmatpush2.bf16.msra.mxu0 0
  %2150 = vmatprep.subr.bf16.mxu0 0
  %2151 = vmatpush2.bf16.msra.mxu0 0
  %2152 = vmatprep.mubr.bf16.mxu0 0
  %2153 = vmatmul.mubr.bf16.gmra.mxu0 %v2069
  %v2154 = vpop.f32.mrf.mxu0
  %v2155 = vadd.f32 %v2060, %v2154
  %v2156 = vpop.f32.mrf.mxu0
  %v2157 = vpop.f32.mrf.mxu0
  %v2158 = vadd.f32 %v2060, %v2157
  %v2159 = vpop.f32.mrf.mxu0
  %2160 = vmatprep.mubr.bf16.mxu0 0
  %2161 = vmatmul.mubr.bf16.gmra.mxu0 %v2072
  %v2162 = vpop.f32.mrf.mxu0
  %v2163 = vadd.f32 %v2060, %v2162
  %v2164 = vpop.f32.mrf.mxu0
  %v2165 = vpop.f32.mrf.mxu0
  %v2166 = vadd.f32 %v2060, %v2165
  %v2167 = vpop.f32.mrf.mxu0
  %2168 = vmatprep.mubr.bf16.mxu0 0
  %2169 = vmatmul.mubr.bf16.gmra.mxu0 %v2075
  %v2170 = vpop.f32.mrf.mxu0
  %v2171 = vadd.f32 %v2060, %v2170
  %v2172 = vpop.f32.mrf.mxu0
  %v2173 = vpop.f32.mrf.mxu0
  %v2174 = vadd.f32 %v2060, %v2173
  %v2175 = vpop.f32.mrf.mxu0
  %2176 = vmatprep.mubr.bf16.mxu0 0
  %2177 = vmatmul.mubr.bf16.gmra.mxu0 %v2078
  %v2178 = vpop.f32.mrf.mxu0
  %v2179 = vadd.f32 %v2060, %v2178
  %v2180 = vpop.f32.mrf.mxu0
  %v2181 = vpop.f32.mrf.mxu0
  %v2182 = vadd.f32 %v2060, %v2181
  %v2183 = vpop.f32.mrf.mxu0
  %2184 = vmatprep.mubr.bf16.mxu0 0
  %2185 = vmatmul.mubr.bf16.gmra.mxu0 %v2081
  %v2186 = vpop.f32.mrf.mxu0
  %v2187 = vadd.f32 %v2060, %v2186
  %v2188 = vpop.f32.mrf.mxu0
  %v2189 = vpop.f32.mrf.mxu0
  %v2190 = vadd.f32 %v2060, %v2189
  %v2191 = vpop.f32.mrf.mxu0
  %2192 = vmatprep.mubr.bf16.mxu0 0
  %2193 = vmatmul.mubr.bf16.gmra.mxu0 %v2084
  %v2194 = vpop.f32.mrf.mxu0
  %v2195 = vadd.f32 %v2060, %v2194
  %v2196 = vpop.f32.mrf.mxu0
  %v2197 = vpop.f32.mrf.mxu0
  %v2198 = vadd.f32 %v2060, %v2197
  %v2199 = vpop.f32.mrf.mxu0
  %2200 = vmatprep.mubr.bf16.mxu0 0
  %2201 = vmatmul.mubr.bf16.gmra.mxu0 %v2087
  %v2202 = vpop.f32.mrf.mxu0
  %v2203 = vadd.f32 %v2060, %v2202
  %v2204 = vpop.f32.mrf.mxu0
  %v2205 = vpop.f32.mrf.mxu0
  %v2206 = vadd.f32 %v2060, %v2205
  %v2207 = vpop.f32.mrf.mxu0
  %2208 = vmatprep.mubr.bf16.mxu0 0
  %2209 = vmatmul.mubr.bf16.gmra.mxu0 %v2090
  %v2210 = vpop.f32.mrf.mxu0
  %v2211 = vadd.f32 %v2060, %v2210
  %v2212 = vpop.f32.mrf.mxu0
  %v2213 = vpop.f32.mrf.mxu0
  %v2214 = vadd.f32 %v2060, %v2213
  %v2215 = vpop.f32.mrf.mxu0
  %2216 = vmatprep.mubr.bf16.mxu0 0
  %2217 = vmatmul.mubr.bf16.gmra.mxu0 %v2093
  %v2218 = vpop.f32.mrf.mxu0
  %v2219 = vadd.f32 %v2060, %v2218
  %v2220 = vpop.f32.mrf.mxu0
  %v2221 = vpop.f32.mrf.mxu0
  %v2222 = vadd.f32 %v2060, %v2221
  %v2223 = vpop.f32.mrf.mxu0
  %2224 = vmatprep.mubr.bf16.mxu0 0
  %2225 = vmatmul.mubr.bf16.gmra.mxu0 %v2096
  %v2226 = vpop.f32.mrf.mxu0
  %v2227 = vadd.f32 %v2060, %v2226
  %v2228 = vpop.f32.mrf.mxu0
  %v2229 = vpop.f32.mrf.mxu0
  %v2230 = vadd.f32 %v2060, %v2229
  %v2231 = vpop.f32.mrf.mxu0
  %2232 = vmatprep.mubr.bf16.mxu0 0
  %2233 = vmatmul.mubr.bf16.gmra.mxu0 %v2099
  %v2234 = vpop.f32.mrf.mxu0
  %v2235 = vadd.f32 %v2060, %v2234
  %v2236 = vpop.f32.mrf.mxu0
  %v2237 = vpop.f32.mrf.mxu0
  %v2238 = vadd.f32 %v2060, %v2237
  %v2239 = vpop.f32.mrf.mxu0
  %2240 = vmatprep.mubr.bf16.mxu0 0
  %2241 = vmatmul.mubr.bf16.gmra.mxu0 %v2102
  %v2242 = vpop.f32.mrf.mxu0
  %v2243 = vadd.f32 %v2060, %v2242
  %v2244 = vpop.f32.mrf.mxu0
  %v2245 = vpop.f32.mrf.mxu0
  %v2246 = vadd.f32 %v2060, %v2245
  %v2247 = vpop.f32.mrf.mxu0
  %2248 = vmatprep.mubr.bf16.mxu0 0
  %2249 = vmatmul.mubr.bf16.gmra.mxu0 %v2105
  %v2250 = vpop.f32.mrf.mxu0
  %v2251 = vadd.f32 %v2060, %v2250
  %v2252 = vpop.f32.mrf.mxu0
  %v2253 = vpop.f32.mrf.mxu0
  %v2254 = vadd.f32 %v2060, %v2253
  %v2255 = vpop.f32.mrf.mxu0
  %2256 = vmatprep.mubr.bf16.mxu0 0
  %2257 = vmatmul.mubr.bf16.gmra.mxu0 %v2108
  %v2258 = vpop.f32.mrf.mxu0
  %v2259 = vadd.f32 %v2060, %v2258
  %v2260 = vpop.f32.mrf.mxu0
  %v2261 = vpop.f32.mrf.mxu0
  %v2262 = vadd.f32 %v2060, %v2261
  %v2263 = vpop.f32.mrf.mxu0
  %2264 = vmatprep.mubr.bf16.mxu0 0
  %2265 = vmatmul.mubr.bf16.gmra.mxu0 %v2111
  %v2266 = vpop.f32.mrf.mxu0
  %v2267 = vadd.f32 %v2060, %v2266
  %v2268 = vpop.f32.mrf.mxu0
  %v2269 = vpop.f32.mrf.mxu0
  %v2270 = vadd.f32 %v2060, %v2269
  %v2271 = vpop.f32.mrf.mxu0
  %2272 = vmatprep.mubr.bf16.mxu0 0
  %2273 = vmatmul.mubr.bf16.gmra.mxu0 %v2114
  %v2274 = vpop.f32.mrf.mxu0
  %v2275 = vadd.f32 %v2060, %v2274
  %v2276 = vpop.f32.mrf.mxu0
  %v2277 = vpop.f32.mrf.mxu0
  %v2278 = vadd.f32 %v2060, %v2277
  %v2279 = vpop.f32.mrf.mxu0
  %2280 = vdwg.mxu0
  %v2281 = vsel %vm2067, %v2155, -inf
  %2282 = vmax.xlane.f32.xlu0 %v2281
  %v2283 = vpop.xlane.xlu0 %2282
  %v2284 = vsel %vm2067, %v2158, -inf
  %2285 = vmax.xlane.f32.xlu0 %v2284
  %v2286 = vpop.xlane.xlu0 %2285
  %v2287 = vsel %vm2067, %v2163, -inf
  %2288 = vmax.xlane.f32.xlu0 %v2287
  %v2289 = vpop.xlane.xlu0 %2288
  %v2290 = vsel %vm2067, %v2166, -inf
  %2291 = vmax.xlane.f32.xlu0 %v2290
  %v2292 = vpop.xlane.xlu0 %2291
  %v2293 = vsel %vm2067, %v2171, -inf
  %2294 = vmax.xlane.f32.xlu0 %v2293
  %v2295 = vpop.xlane.xlu0 %2294
  %v2296 = vsel %vm2067, %v2174, -inf
  %2297 = vmax.xlane.f32.xlu0 %v2296
  %v2298 = vpop.xlane.xlu0 %2297
  %v2299 = vsel %vm2067, %v2179, -inf
  %2300 = vmax.xlane.f32.xlu0 %v2299
  %v2301 = vpop.xlane.xlu0 %2300
  %v2302 = vsel %vm2067, %v2182, -inf
  %2303 = vmax.xlane.f32.xlu0 %v2302
  %v2304 = vpop.xlane.xlu0 %2303
  %v2305 = vsel %vm2067, %v2187, -inf
  %2306 = vmax.xlane.f32.xlu0 %v2305
  %v2307 = vpop.xlane.xlu0 %2306
  %v2308 = vsel %vm2067, %v2190, -inf
  %2309 = vmax.xlane.f32.xlu0 %v2308
  %v2310 = vpop.xlane.xlu0 %2309
  %v2311 = vsel %vm2067, %v2195, -inf
  %2312 = vmax.xlane.f32.xlu0 %v2311
  %v2313 = vpop.xlane.xlu0 %2312
  %v2314 = vsel %vm2067, %v2198, -inf
  %2315 = vmax.xlane.f32.xlu0 %v2314
  %v2316 = vpop.xlane.xlu0 %2315
  %v2317 = vsel %vm2067, %v2203, -inf
  %2318 = vmax.xlane.f32.xlu0 %v2317
  %v2319 = vpop.xlane.xlu0 %2318
  %v2320 = vsel %vm2067, %v2206, -inf
  %2321 = vmax.xlane.f32.xlu0 %v2320
  %v2322 = vpop.xlane.xlu0 %2321
  %v2323 = vsel %vm2067, %v2211, -inf
  %2324 = vmax.xlane.f32.xlu0 %v2323
  %v2325 = vpop.xlane.xlu0 %2324
  %v2326 = vsel %vm2067, %v2214, -inf
  %2327 = vmax.xlane.f32.xlu0 %v2326
  %v2328 = vpop.xlane.xlu0 %2327
  %v2329 = vsel %vm2067, %v2219, -inf
  %2330 = vmax.xlane.f32.xlu0 %v2329
  %v2331 = vpop.xlane.xlu0 %2330
  %v2332 = vsel %vm2067, %v2222, -inf
  %2333 = vmax.xlane.f32.xlu0 %v2332
  %v2334 = vpop.xlane.xlu0 %2333
  %v2335 = vsel %vm2067, %v2227, -inf
  %2336 = vmax.xlane.f32.xlu0 %v2335
  %v2337 = vpop.xlane.xlu0 %2336
  %v2338 = vsel %vm2067, %v2230, -inf
  %2339 = vmax.xlane.f32.xlu0 %v2338
  %v2340 = vpop.xlane.xlu0 %2339
  %v2341 = vsel %vm2067, %v2235, -inf
  %2342 = vmax.xlane.f32.xlu0 %v2341
  %v2343 = vpop.xlane.xlu0 %2342
  %v2344 = vsel %vm2067, %v2238, -inf
  %2345 = vmax.xlane.f32.xlu0 %v2344
  %v2346 = vpop.xlane.xlu0 %2345
  %v2347 = vsel %vm2067, %v2243, -inf
  %2348 = vmax.xlane.f32.xlu0 %v2347
  %v2349 = vpop.xlane.xlu0 %2348
  %v2350 = vsel %vm2067, %v2246, -inf
  %2351 = vmax.xlane.f32.xlu0 %v2350
  %v2352 = vpop.xlane.xlu0 %2351
  %v2353 = vsel %vm2067, %v2251, -inf
  %2354 = vmax.xlane.f32.xlu0 %v2353
  %v2355 = vpop.xlane.xlu0 %2354
  %v2356 = vsel %vm2067, %v2254, -inf
  %2357 = vmax.xlane.f32.xlu0 %v2356
  %v2358 = vpop.xlane.xlu0 %2357
  %v2359 = vsel %vm2067, %v2259, -inf
  %2360 = vmax.xlane.f32.xlu0 %v2359
  %v2361 = vpop.xlane.xlu0 %2360
  %v2362 = vsel %vm2067, %v2262, -inf
  %2363 = vmax.xlane.f32.xlu0 %v2362
  %v2364 = vpop.xlane.xlu0 %2363
  %v2365 = vsel %vm2067, %v2267, -inf
  %2366 = vmax.xlane.f32.xlu0 %v2365
  %v2367 = vpop.xlane.xlu0 %2366
  %v2368 = vsel %vm2067, %v2270, -inf
  %2369 = vmax.xlane.f32.xlu0 %v2368
  %v2370 = vpop.xlane.xlu0 %2369
  %v2371 = vsel %vm2067, %v2275, -inf
  %2372 = vmax.xlane.f32.xlu0 %v2371
  %v2373 = vpop.xlane.xlu0 %2372
  %v2374 = vsel %vm2067, %v2278, -inf
  %2375 = vmax.xlane.f32.xlu0 %v2374
  %v2376 = vpop.xlane.xlu0 %2375
  %v2377 = vsub.f32 %v2155, %v2283
  %v2378 = vsub.f32 %v2158, %v2286
  %v2379 = vsub.f32 %v2163, %v2289
  %v2380 = vsub.f32 %v2166, %v2292
  %v2381 = vsub.f32 %v2171, %v2295
  %v2382 = vsub.f32 %v2174, %v2298
  %v2383 = vsub.f32 %v2179, %v2301
  %v2384 = vsub.f32 %v2182, %v2304
  %v2385 = vsub.f32 %v2187, %v2307
  %v2386 = vsub.f32 %v2190, %v2310
  %v2387 = vsub.f32 %v2195, %v2313
  %v2388 = vsub.f32 %v2198, %v2316
  %v2389 = vsub.f32 %v2203, %v2319
  %v2390 = vsub.f32 %v2206, %v2322
  %v2391 = vsub.f32 %v2211, %v2325
  %v2392 = vsub.f32 %v2214, %v2328
  %v2393 = vsub.f32 %v2219, %v2331
  %v2394 = vsub.f32 %v2222, %v2334
  %v2395 = vsub.f32 %v2227, %v2337
  %v2396 = vsub.f32 %v2230, %v2340
  %v2397 = vsub.f32 %v2235, %v2343
  %v2398 = vsub.f32 %v2238, %v2346
  %v2399 = vsub.f32 %v2243, %v2349
  %v2400 = vsub.f32 %v2246, %v2352
  %v2401 = vsub.f32 %v2251, %v2355
  %v2402 = vsub.f32 %v2254, %v2358
  %v2403 = vsub.f32 %v2259, %v2361
  %v2404 = vsub.f32 %v2262, %v2364
  %v2405 = vsub.f32 %v2267, %v2367
  %v2406 = vsub.f32 %v2270, %v2370
  %v2407 = vsub.f32 %v2275, %v2373
  %v2408 = vsub.f32 %v2278, %v2376
  %v2409 = vmul.f32 %v2377, 1.442695
  %v2410 = vpow.pop %v2409
  %v2411 = vmul.f32 %v2378, 1.442695
  %v2412 = vpow.pop %v2411
  %v2413 = vmul.f32 %v2379, 1.442695
  %v2414 = vpow.pop %v2413
  %v2415 = vmul.f32 %v2380, 1.442695
  %v2416 = vpow.pop %v2415
  %v2417 = vmul.f32 %v2381, 1.442695
  %v2418 = vpow.pop %v2417
  %v2419 = vmul.f32 %v2382, 1.442695
  %v2420 = vpow.pop %v2419
  %v2421 = vmul.f32 %v2383, 1.442695
  %v2422 = vpow.pop %v2421
  %v2423 = vmul.f32 %v2384, 1.442695
  %v2424 = vpow.pop %v2423
  %v2425 = vmul.f32 %v2385, 1.442695
  %v2426 = vpow.pop %v2425
  %v2427 = vmul.f32 %v2386, 1.442695
  %v2428 = vpow.pop %v2427
  %v2429 = vmul.f32 %v2387, 1.442695
  %v2430 = vpow.pop %v2429
  %v2431 = vmul.f32 %v2388, 1.442695
  %v2432 = vpow.pop %v2431
  %v2433 = vmul.f32 %v2389, 1.442695
  %v2434 = vpow.pop %v2433
  %v2435 = vmul.f32 %v2390, 1.442695
  %v2436 = vpow.pop %v2435
  %v2437 = vmul.f32 %v2391, 1.442695
  %v2438 = vpow.pop %v2437
  %v2439 = vmul.f32 %v2392, 1.442695
  %v2440 = vpow.pop %v2439
  %v2441 = vmul.f32 %v2393, 1.442695
  %v2442 = vpow.pop %v2441
  %v2443 = vmul.f32 %v2394, 1.442695
  %v2444 = vpow.pop %v2443
  %v2445 = vmul.f32 %v2395, 1.442695
  %v2446 = vpow.pop %v2445
  %v2447 = vmul.f32 %v2396, 1.442695
  %v2448 = vpow.pop %v2447
  %v2449 = vmul.f32 %v2397, 1.442695
  %v2450 = vpow.pop %v2449
  %v2451 = vmul.f32 %v2398, 1.442695
  %v2452 = vpow.pop %v2451
  %v2453 = vmul.f32 %v2399, 1.442695
  %v2454 = vpow.pop %v2453
  %v2455 = vmul.f32 %v2400, 1.442695
  %v2456 = vpow.pop %v2455
  %v2457 = vmul.f32 %v2401, 1.442695
  %v2458 = vpow.pop %v2457
  %v2459 = vmul.f32 %v2402, 1.442695
  %v2460 = vpow.pop %v2459
  %v2461 = vmul.f32 %v2403, 1.442695
  %v2462 = vpow.pop %v2461
  %v2463 = vmul.f32 %v2404, 1.442695
  %v2464 = vpow.pop %v2463
  %v2465 = vmul.f32 %v2405, 1.442695
  %v2466 = vpow.pop %v2465
  %v2467 = vmul.f32 %v2406, 1.442695
  %v2468 = vpow.pop %v2467
  %v2469 = vmul.f32 %v2407, 1.442695
  %v2470 = vpow.pop %v2469
  %v2471 = vmul.f32 %v2408, 1.442695
  %v2472 = vpow.pop %v2471
  %v2473 = vsel %vm2067, %v2410, 0.0
  %2474 = vadd.xlane.f32.xlu0 %v2473
  %v2475 = vpop.xlane.xlu0 %2474
  %v2476 = vsel %vm2067, %v2412, 0.0
  %2477 = vadd.xlane.f32.xlu0 %v2476
  %v2478 = vpop.xlane.xlu0 %2477
  %v2479 = vsel %vm2067, %v2414, 0.0
  %2480 = vadd.xlane.f32.xlu0 %v2479
  %v2481 = vpop.xlane.xlu0 %2480
  %v2482 = vsel %vm2067, %v2416, 0.0
  %2483 = vadd.xlane.f32.xlu0 %v2482
  %v2484 = vpop.xlane.xlu0 %2483
  %v2485 = vsel %vm2067, %v2418, 0.0
  %2486 = vadd.xlane.f32.xlu0 %v2485
  %v2487 = vpop.xlane.xlu0 %2486
  %v2488 = vsel %vm2067, %v2420, 0.0
  %2489 = vadd.xlane.f32.xlu0 %v2488
  %v2490 = vpop.xlane.xlu0 %2489
  %v2491 = vsel %vm2067, %v2422, 0.0
  %2492 = vadd.xlane.f32.xlu0 %v2491
  %v2493 = vpop.xlane.xlu0 %2492
  %v2494 = vsel %vm2067, %v2424, 0.0
  %2495 = vadd.xlane.f32.xlu0 %v2494
  %v2496 = vpop.xlane.xlu0 %2495
  %v2497 = vsel %vm2067, %v2426, 0.0
  %2498 = vadd.xlane.f32.xlu0 %v2497
  %v2499 = vpop.xlane.xlu0 %2498
  %v2500 = vsel %vm2067, %v2428, 0.0
  %2501 = vadd.xlane.f32.xlu0 %v2500
  %v2502 = vpop.xlane.xlu0 %2501
  %v2503 = vsel %vm2067, %v2430, 0.0
  %2504 = vadd.xlane.f32.xlu0 %v2503
  %v2505 = vpop.xlane.xlu0 %2504
  %v2506 = vsel %vm2067, %v2432, 0.0
  %2507 = vadd.xlane.f32.xlu0 %v2506
  %v2508 = vpop.xlane.xlu0 %2507
  %v2509 = vsel %vm2067, %v2434, 0.0
  %2510 = vadd.xlane.f32.xlu0 %v2509
  %v2511 = vpop.xlane.xlu0 %2510
  %v2512 = vsel %vm2067, %v2436, 0.0
  %2513 = vadd.xlane.f32.xlu0 %v2512
  %v2514 = vpop.xlane.xlu0 %2513
  %v2515 = vsel %vm2067, %v2438, 0.0
  %2516 = vadd.xlane.f32.xlu0 %v2515
  %v2517 = vpop.xlane.xlu0 %2516
  %v2518 = vsel %vm2067, %v2440, 0.0
  %2519 = vadd.xlane.f32.xlu0 %v2518
  %v2520 = vpop.xlane.xlu0 %2519
  %v2521 = vsel %vm2067, %v2442, 0.0
  %2522 = vadd.xlane.f32.xlu0 %v2521
  %v2523 = vpop.xlane.xlu0 %2522
  %v2524 = vsel %vm2067, %v2444, 0.0
  %2525 = vadd.xlane.f32.xlu0 %v2524
  %v2526 = vpop.xlane.xlu0 %2525
  %v2527 = vsel %vm2067, %v2446, 0.0
  %2528 = vadd.xlane.f32.xlu0 %v2527
  %v2529 = vpop.xlane.xlu0 %2528
  %v2530 = vsel %vm2067, %v2448, 0.0
  %2531 = vadd.xlane.f32.xlu0 %v2530
  %v2532 = vpop.xlane.xlu0 %2531
  %v2533 = vsel %vm2067, %v2450, 0.0
  %2534 = vadd.xlane.f32.xlu0 %v2533
  %v2535 = vpop.xlane.xlu0 %2534
  %v2536 = vsel %vm2067, %v2452, 0.0
  %2537 = vadd.xlane.f32.xlu0 %v2536
  %v2538 = vpop.xlane.xlu0 %2537
  %v2539 = vsel %vm2067, %v2454, 0.0
  %2540 = vadd.xlane.f32.xlu0 %v2539
  %v2541 = vpop.xlane.xlu0 %2540
  %v2542 = vsel %vm2067, %v2456, 0.0
  %2543 = vadd.xlane.f32.xlu0 %v2542
  %v2544 = vpop.xlane.xlu0 %2543
  %v2545 = vsel %vm2067, %v2458, 0.0
  %2546 = vadd.xlane.f32.xlu0 %v2545
  %v2547 = vpop.xlane.xlu0 %2546
  %v2548 = vsel %vm2067, %v2460, 0.0
  %2549 = vadd.xlane.f32.xlu0 %v2548
  %v2550 = vpop.xlane.xlu0 %2549
  %v2551 = vsel %vm2067, %v2462, 0.0
  %2552 = vadd.xlane.f32.xlu0 %v2551
  %v2553 = vpop.xlane.xlu0 %2552
  %v2554 = vsel %vm2067, %v2464, 0.0
  %2555 = vadd.xlane.f32.xlu0 %v2554
  %v2556 = vpop.xlane.xlu0 %2555
  %v2557 = vsel %vm2067, %v2466, 0.0
  %2558 = vadd.xlane.f32.xlu0 %v2557
  %v2559 = vpop.xlane.xlu0 %2558
  %v2560 = vsel %vm2067, %v2468, 0.0
  %2561 = vadd.xlane.f32.xlu0 %v2560
  %v2562 = vpop.xlane.xlu0 %2561
  %v2563 = vsel %vm2067, %v2470, 0.0
  %2564 = vadd.xlane.f32.xlu0 %v2563
  %v2565 = vpop.xlane.xlu0 %2564
  %v2566 = vsel %vm2067, %v2472, 0.0
  %2567 = vadd.xlane.f32.xlu0 %v2566
  %v2568 = vpop.xlane.xlu0 %2567
  %v2569 = vrcp.pop %v2475
  %v2570 = vrcp.pop %v2478
  %v2571 = vrcp.pop %v2481
  %v2572 = vrcp.pop %v2484
  %v2573 = vrcp.pop %v2487
  %v2574 = vrcp.pop %v2490
  %v2575 = vrcp.pop %v2493
  %v2576 = vrcp.pop %v2496
  %v2577 = vrcp.pop %v2499
  %v2578 = vrcp.pop %v2502
  %v2579 = vrcp.pop %v2505
  %v2580 = vrcp.pop %v2508
  %v2581 = vrcp.pop %v2511
  %v2582 = vrcp.pop %v2514
  %v2583 = vrcp.pop %v2517
  %v2584 = vrcp.pop %v2520
  %v2585 = vrcp.pop %v2523
  %v2586 = vrcp.pop %v2526
  %v2587 = vrcp.pop %v2529
  %v2588 = vrcp.pop %v2532
  %v2589 = vrcp.pop %v2535
  %v2590 = vrcp.pop %v2538
  %v2591 = vrcp.pop %v2541
  %v2592 = vrcp.pop %v2544
  %v2593 = vrcp.pop %v2547
  %v2594 = vrcp.pop %v2550
  %v2595 = vrcp.pop %v2553
  %v2596 = vrcp.pop %v2556
  %v2597 = vrcp.pop %v2559
  %v2598 = vrcp.pop %v2562
  %v2599 = vrcp.pop %v2565
  %v2600 = vrcp.pop %v2568
  %v2601 = vmul.f32 %v2410, %v2569
  %v2602 = vmul.f32 %v2412, %v2570
  %v2603 = vmul.f32 %v2414, %v2571
  %v2604 = vmul.f32 %v2416, %v2572
  %v2605 = vmul.f32 %v2418, %v2573
  %v2606 = vmul.f32 %v2420, %v2574
  %v2607 = vmul.f32 %v2422, %v2575
  %v2608 = vmul.f32 %v2424, %v2576
  %v2609 = vmul.f32 %v2426, %v2577
  %v2610 = vmul.f32 %v2428, %v2578
  %v2611 = vmul.f32 %v2430, %v2579
  %v2612 = vmul.f32 %v2432, %v2580
  %v2613 = vmul.f32 %v2434, %v2581
  %v2614 = vmul.f32 %v2436, %v2582
  %v2615 = vmul.f32 %v2438, %v2583
  %v2616 = vmul.f32 %v2440, %v2584
  %v2617 = vmul.f32 %v2442, %v2585
  %v2618 = vmul.f32 %v2444, %v2586
  %v2619 = vmul.f32 %v2446, %v2587
  %v2620 = vmul.f32 %v2448, %v2588
  %v2621 = vmul.f32 %v2450, %v2589
  %v2622 = vmul.f32 %v2452, %v2590
  %v2623 = vmul.f32 %v2454, %v2591
  %v2624 = vmul.f32 %v2456, %v2592
  %v2625 = vmul.f32 %v2458, %v2593
  %v2626 = vmul.f32 %v2460, %v2594
  %v2627 = vmul.f32 %v2462, %v2595
  %v2628 = vmul.f32 %v2464, %v2596
  %v2629 = vmul.f32 %v2466, %v2597
  %v2630 = vmul.f32 %v2468, %v2598
  %v2631 = vmul.f32 %v2470, %v2599
  %v2632 = vmul.f32 %v2472, %v2600
  %2633 = vst.msk [vmem:[%s9] sm:$0xff] %vm2067, %v2601
  %2634 = vst.msk [vmem:[%s9 + $0x8] sm:$0xff] %vm2067, %v2602
  %2635 = vst.msk [vmem:[%s9 + $0x10] sm:$0xff] %vm2067, %v2603
  %2636 = vst.msk [vmem:[%s9 + $0x18] sm:$0xff] %vm2067, %v2604
  %2637 = vst.msk [vmem:[%s9 + $0x20] sm:$0xff] %vm2067, %v2605
  %2638 = vst.msk [vmem:[%s9 + $0x28] sm:$0xff] %vm2067, %v2606
  %2639 = vst.msk [vmem:[%s9 + $0x30] sm:$0xff] %vm2067, %v2607
  %2640 = vst.msk [vmem:[%s9 + $0x38] sm:$0xff] %vm2067, %v2608
  %2641 = vst.msk [vmem:[%s9 + $0x40] sm:$0xff] %vm2067, %v2609
  %2642 = vst.msk [vmem:[%s9 + $0x48] sm:$0xff] %vm2067, %v2610
  %2643 = vst.msk [vmem:[%s9 + $0x50] sm:$0xff] %vm2067, %v2611
  %2644 = vst.msk [vmem:[%s9 + $0x58] sm:$0xff] %vm2067, %v2612
  %2645 = vst.msk [vmem:[%s9 + $0x60] sm:$0xff] %vm2067, %v2613
  %2646 = vst.msk [vmem:[%s9 + $0x68] sm:$0xff] %vm2067, %v2614
  %2647 = vst.msk [vmem:[%s9 + $0x70] sm:$0xff] %vm2067, %v2615
  %2648 = vst.msk [vmem:[%s9 + $0x78] sm:$0xff] %vm2067, %v2616
  %2649 = vst.msk [vmem:[%s9 + $0x80] sm:$0xff] %vm2067, %v2617
  %2650 = vst.msk [vmem:[%s9 + $0x88] sm:$0xff] %vm2067, %v2618
  %2651 = vst.msk [vmem:[%s9 + $0x90] sm:$0xff] %vm2067, %v2619
  %2652 = vst.msk [vmem:[%s9 + $0x98] sm:$0xff] %vm2067, %v2620
  %2653 = vst.msk [vmem:[%s9 + $0xa0] sm:$0xff] %vm2067, %v2621
  %2654 = vst.msk [vmem:[%s9 + $0xa8] sm:$0xff] %vm2067, %v2622
  %2655 = vst.msk [vmem:[%s9 + $0xb0] sm:$0xff] %vm2067, %v2623
  %2656 = vst.msk [vmem:[%s9 + $0xb8] sm:$0xff] %vm2067, %v2624
  %2657 = vst.msk [vmem:[%s9 + $0xc0] sm:$0xff] %vm2067, %v2625
  %2658 = vst.msk [vmem:[%s9 + $0xc8] sm:$0xff] %vm2067, %v2626
  %2659 = vst.msk [vmem:[%s9 + $0xd0] sm:$0xff] %vm2067, %v2627
  %2660 = vst.msk [vmem:[%s9 + $0xd8] sm:$0xff] %vm2067, %v2628
  %2661 = vst.msk [vmem:[%s9 + $0xe0] sm:$0xff] %vm2067, %v2629
  %2662 = vst.msk [vmem:[%s9 + $0xe8] sm:$0xff] %vm2067, %v2630
  %2663 = vst.msk [vmem:[%s9 + $0xf0] sm:$0xff] %vm2067, %v2631
  %2664 = vst.msk [vmem:[%s9 + $0xf8] sm:$0xff] %vm2067, %v2632
  // Predicated region
  $region38: #{tpu_custom_call.1} parent=0 // pred_check
    _
  $region39: #{tpu_custom_call.1} parent=0 // pred_check_branch
    %2666 = sbr.rel (0) target = $region41
  $region40: #{tpu_custom_call.1} parent=0 // pred_region
    _
  $region41: #{tpu_custom_call.1} parent=0 // pred_fallthru
    _
  // Predicated region
  $region42: #{tpu_custom_call.1} parent=0 // pred_check
    _
  $region43: #{tpu_custom_call.1} parent=0 // pred_check_branch
    %2668 = sbr.rel (0) target = $region45
  $region44: #{tpu_custom_call.1} parent=0 // pred_region
    _
  $region45: #{tpu_custom_call.1} parent=0 // pred_fallthru
    _

</llo_original>
